<compile_context>
chip_gen: v7x
topology: tpu7x:2x2x1
jax: 0.10.0
libtpu: 0.0.40
codegen_flags: <defaults>
</compile_context>

<pallas_src>
import functools

import jax
import jax.numpy as jnp
from jax import lax
from jax.experimental import pallas as pl
from jax.experimental.pallas import tpu as pltpu


def _round_up(n, m):
    return ((n + m - 1) // m) * m


def _encdec_kernel(x_ref, w_ref, out_ref, *, batch, hidden_size, input_size,
                   seq_len, max_len_out, offs):
    B, H, D, T, L = batch, hidden_size, input_size, seq_len, max_len_out
    G = 4 * H

    # Per-lane affine recovering tanh for the g-gate block from one full-width
    # sigmoid: tanh(z) = 2*sigmoid(2z) - 1 (the 2z comes from wrapper-side
    # pre-scaling of the g-gate weight columns).  scale=[1,1,2,1],
    # shift=[0,0,-1,0] per H-wide block.  Hoisted out of the recurrences.
    lane = lax.broadcasted_iota(jnp.int32, (B, G), 1)
    is_g = jnp.logical_and(lane >= 2 * H, lane < 3 * H)
    gate_scale = jnp.where(is_g, jnp.float32(2.0), jnp.float32(1.0))
    gate_shift = jnp.where(is_g, jnp.float32(-1.0), jnp.float32(0.0))

    def gate_update(gates, c):
        # One full-width sigmoid (EUP) instead of 3 sigmoids + 1 tanh on
        # quarter-width slices; the g gate is recovered with a VPU affine.
        s = jax.nn.sigmoid(gates)
        act = s * gate_scale + gate_shift
        i = act[:, 0:H]
        f = act[:, H:2 * H]
        g = act[:, 2 * H:3 * H]
        o = act[:, 3 * H:4 * H]
        c_new = f * c + i * g
        h_new = o * jnp.tanh(c_new)      # only remaining second EUP op per step
        return h_new, c_new

    def wslab(name, rows):
        r = offs[name]
        return w_ref[r:r + rows, 0:G]

    wih_e = wslab("wih_e", D)
    whh_e = wslab("whh_e", H)
    b_e = wslab("b_e", 1)
    wih_d = wslab("wih_d", D)
    b_d = wslab("b_d", 1)
    whh_d = wslab("whh_d", H)
    w_dec = wslab("w_dec", H)
    b_dec = wslab("b_dec", 1)

    x_all = x_ref[...]                                       # (T*B, D)

    # ---- encoder input projection hoisted out of the recurrence ----
    xproj = jnp.dot(x_all, wih_e, preferred_element_type=jnp.float32) + b_e

    # ---- decoder step-0 input projection hoisted off the serial chain ----
    dec_in0 = x_all[(T - 1) * B:T * B, :]                    # x[:, -1, :]
    dec0_proj = (jnp.dot(dec_in0, wih_d, preferred_element_type=jnp.float32)
                 + b_d)

    h = jnp.zeros((B, H), jnp.float32)
    c = jnp.zeros((B, H), jnp.float32)

    # ---- encoder recurrence: one matmul per step, fully unrolled ----
    for t in range(T):
        gates = (xproj[t * B:(t + 1) * B, :]
                 + jnp.dot(h, whh_e, preferred_element_type=jnp.float32))
        h, c = gate_update(gates, c)

    # ---- decoder step 0 (un-folded form, input projection precomputed) ----
    gates = dec0_proj + jnp.dot(h, whh_d, preferred_element_type=jnp.float32)
    h, c = gate_update(gates, c)
    hs = [h]

    # ---- decoder steps 1..L-1: linear feedback folded into the recurrence ----
    # gates_t = h_{t-1} @ (W_lin^T W_ih_d^T + W_hh_d^T) + (b_lin W_ih_d^T + b_d)
    for _ in range(1, L):
        gates = jnp.dot(h, w_dec, preferred_element_type=jnp.float32) + b_dec
        h, c = gate_update(gates, c)
        hs.append(h)

    # ---- batched output projection + a single lane-dense store ----
    # Decoder history kept as live vregs (no scratch store/reload round trip).
    hs_all = jnp.concatenate(hs, axis=0)                     # (L*B, H)
    wlin = w_ref[offs["wlin"]:offs["wlin"] + H, :]           # (H, OUT_pad)
    blin = w_ref[offs["blin"]:offs["blin"] + 1, :]           # (1, OUT_pad)
    out_ref[...] = (jnp.dot(hs_all, wlin, preferred_element_type=jnp.float32)
                    + blin)


def init_params(key, input_size, hidden_size, output_size):
    """Deterministic PyTorch-style uniform(-1/sqrt(H), 1/sqrt(H)) init."""
    H = hidden_size
    bound = 1.0 / (H ** 0.5)
    keys = jax.random.split(key, 10)

    def u(k, shape):
        return jax.random.uniform(k, shape, jnp.float32, -bound, bound)

    return dict(
        w_ih_e=u(keys[0], (4 * H, input_size)),
        w_hh_e=u(keys[1], (4 * H, H)),
        b_ih_e=u(keys[2], (4 * H,)),
        b_hh_e=u(keys[3], (4 * H,)),
        w_ih_d=u(keys[4], (4 * H, input_size)),
        w_hh_d=u(keys[5], (4 * H, H)),
        b_ih_d=u(keys[6], (4 * H,)),
        b_hh_d=u(keys[7], (4 * H,)),
        w_lin=u(keys[8], (output_size, H)),
        b_lin=u(keys[9], (output_size,)),
    )


def lstm_encoder_decoder(x, params, *, hidden_size, output_size, max_len_out):
    """x: (B, T_in, D) float32 -> outputs: (B, Max_len_out, output_size)."""
    B, T, D = x.shape
    H = hidden_size
    if output_size != D:
        raise ValueError(
            "recursive training_prediction feeds the linear output back as the "
            f"next decoder input, so output_size must equal input_size "
            f"(got output_size={output_size}, input_size={D}).")
    G = 4 * H
    B_pad = _round_up(max(B, 8), 8)                    # full f32 sublanes
    LANES = max(_round_up(G, 128), _round_up(max(output_size, 1), 128))
    OUT_pad = LANES                                    # lane-dense output store

    # Time-major, batch-padded, flattened to 2-D (T*B_pad, D).  Padded batch
    # rows carry benign garbage (e.g. sigmoid(0)=0.5) — rows are independent
    # and sliced off below; never reduce across the batch axis in the kernel.
    x_tm = jnp.transpose(x, (1, 0, 2))                         # (T, B, D)
    x_tm = jnp.pad(x_tm, ((0, 0), (0, B_pad - B), (0, 0)))     # (T, B_pad, D)
    x2d = x_tm.reshape(T * B_pad, D)

    # Pre-scale the g-gate columns by 2 so the kernel can recover tanh from a
    # single full-width sigmoid (tanh(z) = 2*sigmoid(2z) - 1).
    g_scale = jnp.ones((G,), jnp.float32).at[2 * H:3 * H].set(2.0)

    wih_e = params["w_ih_e"].T * g_scale                        # (D, 4H)
    whh_e = params["w_hh_e"].T * g_scale                        # (H, 4H)
    b_e = ((params["b_ih_e"] + params["b_hh_e"]) * g_scale).reshape(1, G)
    wih_d = params["w_ih_d"].T * g_scale                        # (D, 4H)
    whh_d = params["w_hh_d"].T * g_scale                        # (H, 4H)
    b_d = ((params["b_ih_d"] + params["b_hh_d"]) * g_scale).reshape(1, G)
    wlin = params["w_lin"].T                                    # (H, out), unscaled
    blin = params["b_lin"].reshape(1, output_size)

    # Fold the recursive linear feedback into the decoder recurrence (t >= 1).
    # Column (gate) scaling commutes with left-multiplication by W_lin^T, so
    # folding the already-scaled wih_d/whh_d/b_d yields the scaled w_dec/b_dec.
    w_dec = wlin @ wih_d + whh_d                                # (H, 4H)
    b_dec = blin @ wih_d + b_d                                  # (1, 4H)

    # Pack all weight/bias operands into one row-concatenated, 8-row-aligned,
    # lane-padded slab: collapses 11 tiny prologue DMAs into 2.
    sections = [
        ("wih_e", wih_e), ("whh_e", whh_e), ("b_e", b_e),
        ("wih_d", wih_d), ("b_d", b_d), ("whh_d", whh_d),
        ("w_dec", w_dec), ("b_dec", b_dec),
        ("wlin", wlin), ("blin", blin),
    ]
    offs = {}
    off = 0
    for name, arr in sections:
        off = _round_up(off, 8)
        offs[name] = off
        off += arr.shape[0]
    total_rows = _round_up(off, 8)
    w_packed = jnp.zeros((total_rows, LANES), jnp.float32)
    for name, arr in sections:
        r = offs[name]
        w_packed = w_packed.at[r:r + arr.shape[0], :arr.shape[1]].set(
            arr.astype(jnp.float32))

    kernel = functools.partial(
        _encdec_kernel, batch=B_pad, hidden_size=H, input_size=D,
        seq_len=T, max_len_out=max_len_out, offs=offs)

    vmem = pl.BlockSpec(memory_space=pltpu.MemorySpace.VMEM)

    flops = int(2 * (T + max_len_out) * B_pad * (D + H) * G
                + 2 * max_len_out * B_pad * H * OUT_pad)
    transcendentals = int(2 * B_pad * G * (T + max_len_out))
    bytes_accessed = int(4 * (x2d.size + w_packed.size
                              + max_len_out * B_pad * OUT_pad))

    out2d = pl.pallas_call(
        kernel,
        out_shape=jax.ShapeDtypeStruct((max_len_out * B_pad, OUT_pad),
                                       jnp.float32),
        in_specs=[vmem, vmem],
        out_specs=vmem,
        cost_estimate=pl.CostEstimate(flops=flops,
                                      transcendentals=transcendentals,
                                      bytes_accessed=bytes_accessed),
    )(x2d, w_packed)

    out = out2d.reshape(max_len_out, B_pad, OUT_pad)
    out = jnp.transpose(out, (1, 0, 2))                         # (B_pad, L, OUT_pad)
    return out[:B, :, :output_size]


def reference_forward(x, params, hidden_size, max_len_out):
    """Pure-JAX reference mirroring the PyTorch module (recursive mode)."""
    B, T, D = x.shape
    H = hidden_size

    def step(x_t, h, c, w_ih, w_hh, b_ih, b_hh):
        gates = x_t @ w_ih.T + b_ih + h @ w_hh.T + b_hh
        i = jax.nn.sigmoid(gates[:, :H])
        f = jax.nn.sigmoid(gates[:, H:2 * H])
        g = jnp.tanh(gates[:, 2 * H:3 * H])
        o = jax.nn.sigmoid(gates[:, 3 * H:])
        c = f * c + i * g
        h = o * jnp.tanh(c)
        return h, c

    h = jnp.zeros((B, H), jnp.float32)
    c = jnp.zeros((B, H), jnp.float32)
    for t in range(T):
        h, c = step(x[:, t, :], h, c, params["w_ih_e"], params["w_hh_e"],
                    params["b_ih_e"], params["b_hh_e"])
    dec_in = x[:, -1, :]
    outs = []
    for _ in range(max_len_out):
        h, c = step(dec_in, h, c, params["w_ih_d"], params["w_hh_d"],
                    params["b_ih_d"], params["b_hh_d"])
        y = h @ params["w_lin"].T + params["b_lin"]
        outs.append(y)
        dec_in = y
    return jnp.stack(outs, axis=1)


if __name__ == "__main__":
    B, T_IN, D_IN = 2, 8, 4
    HIDDEN, OUT, MAX_LEN_OUT = 32, 4, 8   # recursive mode => OUT == D_IN

    key = jax.random.PRNGKey(0)
    k_x, k_p = jax.random.split(key)
    x = jax.random.normal(k_x, (B, T_IN, D_IN), jnp.float32)
    params = init_params(k_p, D_IN, HIDDEN, OUT)

    out = lstm_encoder_decoder(x, params, hidden_size=HIDDEN,
                               output_size=OUT, max_len_out=MAX_LEN_OUT)
    out = jax.block_until_ready(out)

    ref = reference_forward(x, params, HIDDEN, MAX_LEN_OUT)
    err = float(jnp.max(jnp.abs(out - ref)))
    assert out.shape == (B, MAX_LEN_OUT, OUT), out.shape
    assert err < 1e-3, f"max abs err {err}"
    print("KERNEL_OK")
</pallas_src>

<mosaic_0001>
module attributes {stable_mosaic.version = 11 : i64} {
  func.func @_encdec_kernel(%arg0: memref<64x4xf32, #tpu.memory_space<vmem>>, %arg1: memref<176x128xf32, #tpu.memory_space<vmem>>, %arg2: memref<64x128xf32, #tpu.memory_space<vmem>>) attributes {dimension_semantics = [], scalar_prefetch = 0 : i64, scratch_operands = 0 : i64, tpu.core_type = #tpu.core_type<tc>} {
    %0 = tpu.iota {dimensions = array<i32: 1>} : vector<8x128xi32>
    %c64_i32 = arith.constant 64 : i32
    %1 = vector.broadcast %c64_i32 : i32 to vector<8x128xi32>
    %2 = arith.cmpi sge, %0, %1 : vector<8x128xi32>
    %c96_i32 = arith.constant 96 : i32
    %3 = vector.broadcast %c96_i32 : i32 to vector<8x128xi32>
    %4 = arith.cmpi slt, %0, %3 : vector<8x128xi32>
    %5 = arith.andi %2, %4 : vector<8x128xi1>
    %cst = arith.constant 2.000000e+00 : f32
    %cst_0 = arith.constant 1.000000e+00 : f32
    %6 = vector.broadcast %cst : f32 to vector<8x128xf32>
    %7 = vector.broadcast %cst_0 : f32 to vector<8x128xf32>
    %8 = arith.select %5, %6, %7 : vector<8x128xi1>, vector<8x128xf32>
    %cst_1 = arith.constant -1.000000e+00 : f32
    %cst_2 = arith.constant 0.000000e+00 : f32
    %9 = vector.broadcast %cst_1 : f32 to vector<8x128xf32>
    %10 = vector.broadcast %cst_2 : f32 to vector<8x128xf32>
    %11 = arith.select %5, %9, %10 : vector<8x128xi1>, vector<8x128xf32>
    %c0 = arith.constant 0 : index
    %c0_3 = arith.constant 0 : index
    %12 = vector.load %arg1[%c0, %c0_3] : memref<176x128xf32, #tpu.memory_space<vmem>>, vector<4x128xf32>
    %c8 = arith.constant 8 : index
    %c0_4 = arith.constant 0 : index
    %13 = vector.load %arg1[%c8, %c0_4] : memref<176x128xf32, #tpu.memory_space<vmem>>, vector<32x128xf32>
    %c40 = arith.constant 40 : index
    %c0_5 = arith.constant 0 : index
    %14 = vector.load %arg1[%c40, %c0_5] : memref<176x128xf32, #tpu.memory_space<vmem>>, vector<1x128xf32>
    %c48 = arith.constant 48 : index
    %c0_6 = arith.constant 0 : index
    %15 = vector.load %arg1[%c48, %c0_6] : memref<176x128xf32, #tpu.memory_space<vmem>>, vector<4x128xf32>
    %c56 = arith.constant 56 : index
    %c0_7 = arith.constant 0 : index
    %16 = vector.load %arg1[%c56, %c0_7] : memref<176x128xf32, #tpu.memory_space<vmem>>, vector<1x128xf32>
    %c64 = arith.constant 64 : index
    %c0_8 = arith.constant 0 : index
    %17 = vector.load %arg1[%c64, %c0_8] : memref<176x128xf32, #tpu.memory_space<vmem>>, vector<32x128xf32>
    %c96 = arith.constant 96 : index
    %c0_9 = arith.constant 0 : index
    %18 = vector.load %arg1[%c96, %c0_9] : memref<176x128xf32, #tpu.memory_space<vmem>>, vector<32x128xf32>
    %c128 = arith.constant 128 : index
    %c0_10 = arith.constant 0 : index
    %19 = vector.load %arg1[%c128, %c0_10] : memref<176x128xf32, #tpu.memory_space<vmem>>, vector<1x128xf32>
    %c0_11 = arith.constant 0 : index
    %c0_12 = arith.constant 0 : index
    %20 = vector.load %arg0[%c0_11, %c0_12] : memref<64x4xf32, #tpu.memory_space<vmem>>, vector<64x4xf32>
    %cst_13 = arith.constant dense<0.000000e+00> : vector<64x128xf32>
    %21 = tpu.matmul %20, %12, %cst_13 {dimension_numbers = #tpu.dot_dimension_numbers<[1], [0], [0], [1], [0, 0, 1, 1], [], []>} : vector<64x4xf32>, vector<4x128xf32>, vector<64x128xf32> -> vector<64x128xf32>
    %22 = vector.broadcast %14 : vector<1x128xf32> to vector<64x128xf32>
    %23 = arith.addf %21, %22 : vector<64x128xf32>
    %24 = vector.extract_strided_slice %20 {offsets = [56, 0], sizes = [8, 4], strides = [1, 1]} : vector<64x4xf32> to vector<8x4xf32>
    %cst_14 = arith.constant dense<0.000000e+00> : vector<8x128xf32>
    %25 = tpu.matmul %24, %15, %cst_14 {dimension_numbers = #tpu.dot_dimension_numbers<[1], [0], [0], [1], [0, 0, 1, 1], [], []>} : vector<8x4xf32>, vector<4x128xf32>, vector<8x128xf32> -> vector<8x128xf32>
    %26 = vector.broadcast %16 : vector<1x128xf32> to vector<8x128xf32>
    %27 = arith.addf %25, %26 : vector<8x128xf32>
    %cst_15 = arith.constant 0.000000e+00 : f32
    %28 = vector.broadcast %cst_15 : f32 to vector<8x32xf32>
    %cst_16 = arith.constant 0.000000e+00 : f32
    %29 = vector.broadcast %cst_16 : f32 to vector<8x32xf32>
    %30 = vector.extract_strided_slice %23 {offsets = [0, 0], sizes = [8, 128], strides = [1, 1]} : vector<64x128xf32> to vector<8x128xf32>
    %cst_17 = arith.constant dense<0.000000e+00> : vector<8x128xf32>
    %31 = tpu.matmul %28, %13, %cst_17 {dimension_numbers = #tpu.dot_dimension_numbers<[1], [0], [0], [1], [0, 0, 1, 1], [], []>} : vector<8x32xf32>, vector<32x128xf32>, vector<8x128xf32> -> vector<8x128xf32>
    %32 = arith.addf %30, %31 : vector<8x128xf32>
    %33 = arith.negf %32 : vector<8x128xf32>
    %34 = math.exp %33 : vector<8x128xf32>
    %cst_18 = arith.constant 1.000000e+00 : f32
    %35 = vector.broadcast %cst_18 : f32 to vector<8x128xf32>
    %36 = arith.addf %35, %34 : vector<8x128xf32>
    %37 = arith.divf %35, %36 : vector<8x128xf32>
    %38 = arith.mulf %37, %8 : vector<8x128xf32>
    %39 = arith.addf %38, %11 : vector<8x128xf32>
    %40 = vector.extract_strided_slice %39 {offsets = [0, 0], sizes = [8, 32], strides = [1, 1]} : vector<8x128xf32> to vector<8x32xf32>
    %41 = vector.extract_strided_slice %39 {offsets = [0, 32], sizes = [8, 32], strides = [1, 1]} : vector<8x128xf32> to vector<8x32xf32>
    %42 = vector.extract_strided_slice %39 {offsets = [0, 64], sizes = [8, 32], strides = [1, 1]} : vector<8x128xf32> to vector<8x32xf32>
    %43 = vector.extract_strided_slice %39 {offsets = [0, 96], sizes = [8, 32], strides = [1, 1]} : vector<8x128xf32> to vector<8x32xf32>
    %44 = arith.mulf %41, %29 : vector<8x32xf32>
    %45 = arith.mulf %40, %42 : vector<8x32xf32>
    %46 = arith.addf %44, %45 : vector<8x32xf32>
    %47 = math.tanh %46 : vector<8x32xf32>
    %48 = arith.mulf %43, %47 : vector<8x32xf32>
    %49 = vector.extract_strided_slice %23 {offsets = [8, 0], sizes = [8, 128], strides = [1, 1]} : vector<64x128xf32> to vector<8x128xf32>
    %cst_19 = arith.constant dense<0.000000e+00> : vector<8x128xf32>
    %50 = tpu.matmul %48, %13, %cst_19 {dimension_numbers = #tpu.dot_dimension_numbers<[1], [0], [0], [1], [0, 0, 1, 1], [], []>} : vector<8x32xf32>, vector<32x128xf32>, vector<8x128xf32> -> vector<8x128xf32>
    %51 = arith.addf %49, %50 : vector<8x128xf32>
    %52 = arith.negf %51 : vector<8x128xf32>
    %53 = math.exp %52 : vector<8x128xf32>
    %cst_20 = arith.constant 1.000000e+00 : f32
    %54 = vector.broadcast %cst_20 : f32 to vector<8x128xf32>
    %55 = arith.addf %54, %53 : vector<8x128xf32>
    %56 = arith.divf %54, %55 : vector<8x128xf32>
    %57 = arith.mulf %56, %8 : vector<8x128xf32>
    %58 = arith.addf %57, %11 : vector<8x128xf32>
    %59 = vector.extract_strided_slice %58 {offsets = [0, 0], sizes = [8, 32], strides = [1, 1]} : vector<8x128xf32> to vector<8x32xf32>
    %60 = vector.extract_strided_slice %58 {offsets = [0, 32], sizes = [8, 32], strides = [1, 1]} : vector<8x128xf32> to vector<8x32xf32>
    %61 = vector.extract_strided_slice %58 {offsets = [0, 64], sizes = [8, 32], strides = [1, 1]} : vector<8x128xf32> to vector<8x32xf32>
    %62 = vector.extract_strided_slice %58 {offsets = [0, 96], sizes = [8, 32], strides = [1, 1]} : vector<8x128xf32> to vector<8x32xf32>
    %63 = arith.mulf %60, %46 : vector<8x32xf32>
    %64 = arith.mulf %59, %61 : vector<8x32xf32>
    %65 = arith.addf %63, %64 : vector<8x32xf32>
    %66 = math.tanh %65 : vector<8x32xf32>
    %67 = arith.mulf %62, %66 : vector<8x32xf32>
    %68 = vector.extract_strided_slice %23 {offsets = [16, 0], sizes = [8, 128], strides = [1, 1]} : vector<64x128xf32> to vector<8x128xf32>
    %cst_21 = arith.constant dense<0.000000e+00> : vector<8x128xf32>
    %69 = tpu.matmul %67, %13, %cst_21 {dimension_numbers = #tpu.dot_dimension_numbers<[1], [0], [0], [1], [0, 0, 1, 1], [], []>} : vector<8x32xf32>, vector<32x128xf32>, vector<8x128xf32> -> vector<8x128xf32>
    %70 = arith.addf %68, %69 : vector<8x128xf32>
    %71 = arith.negf %70 : vector<8x128xf32>
    %72 = math.exp %71 : vector<8x128xf32>
    %cst_22 = arith.constant 1.000000e+00 : f32
    %73 = vector.broadcast %cst_22 : f32 to vector<8x128xf32>
    %74 = arith.addf %73, %72 : vector<8x128xf32>
    %75 = arith.divf %73, %74 : vector<8x128xf32>
    %76 = arith.mulf %75, %8 : vector<8x128xf32>
    %77 = arith.addf %76, %11 : vector<8x128xf32>
    %78 = vector.extract_strided_slice %77 {offsets = [0, 0], sizes = [8, 32], strides = [1, 1]} : vector<8x128xf32> to vector<8x32xf32>
    %79 = vector.extract_strided_slice %77 {offsets = [0, 32], sizes = [8, 32], strides = [1, 1]} : vector<8x128xf32> to vector<8x32xf32>
    %80 = vector.extract_strided_slice %77 {offsets = [0, 64], sizes = [8, 32], strides = [1, 1]} : vector<8x128xf32> to vector<8x32xf32>
    %81 = vector.extract_strided_slice %77 {offsets = [0, 96], sizes = [8, 32], strides = [1, 1]} : vector<8x128xf32> to vector<8x32xf32>
    %82 = arith.mulf %79, %65 : vector<8x32xf32>
    %83 = arith.mulf %78, %80 : vector<8x32xf32>
    %84 = arith.addf %82, %83 : vector<8x32xf32>
    %85 = math.tanh %84 : vector<8x32xf32>
    %86 = arith.mulf %81, %85 : vector<8x32xf32>
    %87 = vector.extract_strided_slice %23 {offsets = [24, 0], sizes = [8, 128], strides = [1, 1]} : vector<64x128xf32> to vector<8x128xf32>
    %cst_23 = arith.constant dense<0.000000e+00> : vector<8x128xf32>
    %88 = tpu.matmul %86, %13, %cst_23 {dimension_numbers = #tpu.dot_dimension_numbers<[1], [0], [0], [1], [0, 0, 1, 1], [], []>} : vector<8x32xf32>, vector<32x128xf32>, vector<8x128xf32> -> vector<8x128xf32>
    %89 = arith.addf %87, %88 : vector<8x128xf32>
    %90 = arith.negf %89 : vector<8x128xf32>
    %91 = math.exp %90 : vector<8x128xf32>
    %cst_24 = arith.constant 1.000000e+00 : f32
    %92 = vector.broadcast %cst_24 : f32 to vector<8x128xf32>
    %93 = arith.addf %92, %91 : vector<8x128xf32>
    %94 = arith.divf %92, %93 : vector<8x128xf32>
    %95 = arith.mulf %94, %8 : vector<8x128xf32>
    %96 = arith.addf %95, %11 : vector<8x128xf32>
    %97 = vector.extract_strided_slice %96 {offsets = [0, 0], sizes = [8, 32], strides = [1, 1]} : vector<8x128xf32> to vector<8x32xf32>
    %98 = vector.extract_strided_slice %96 {offsets = [0, 32], sizes = [8, 32], strides = [1, 1]} : vector<8x128xf32> to vector<8x32xf32>
    %99 = vector.extract_strided_slice %96 {offsets = [0, 64], sizes = [8, 32], strides = [1, 1]} : vector<8x128xf32> to vector<8x32xf32>
    %100 = vector.extract_strided_slice %96 {offsets = [0, 96], sizes = [8, 32], strides = [1, 1]} : vector<8x128xf32> to vector<8x32xf32>
    %101 = arith.mulf %98, %84 : vector<8x32xf32>
    %102 = arith.mulf %97, %99 : vector<8x32xf32>
    %103 = arith.addf %101, %102 : vector<8x32xf32>
    %104 = math.tanh %103 : vector<8x32xf32>
    %105 = arith.mulf %100, %104 : vector<8x32xf32>
    %106 = vector.extract_strided_slice %23 {offsets = [32, 0], sizes = [8, 128], strides = [1, 1]} : vector<64x128xf32> to vector<8x128xf32>
    %cst_25 = arith.constant dense<0.000000e+00> : vector<8x128xf32>
    %107 = tpu.matmul %105, %13, %cst_25 {dimension_numbers = #tpu.dot_dimension_numbers<[1], [0], [0], [1], [0, 0, 1, 1], [], []>} : vector<8x32xf32>, vector<32x128xf32>, vector<8x128xf32> -> vector<8x128xf32>
    %108 = arith.addf %106, %107 : vector<8x128xf32>
    %109 = arith.negf %108 : vector<8x128xf32>
    %110 = math.exp %109 : vector<8x128xf32>
    %cst_26 = arith.constant 1.000000e+00 : f32
    %111 = vector.broadcast %cst_26 : f32 to vector<8x128xf32>
    %112 = arith.addf %111, %110 : vector<8x128xf32>
    %113 = arith.divf %111, %112 : vector<8x128xf32>
    %114 = arith.mulf %113, %8 : vector<8x128xf32>
    %115 = arith.addf %114, %11 : vector<8x128xf32>
    %116 = vector.extract_strided_slice %115 {offsets = [0, 0], sizes = [8, 32], strides = [1, 1]} : vector<8x128xf32> to vector<8x32xf32>
    %117 = vector.extract_strided_slice %115 {offsets = [0, 32], sizes = [8, 32], strides = [1, 1]} : vector<8x128xf32> to vector<8x32xf32>
    %118 = vector.extract_strided_slice %115 {offsets = [0, 64], sizes = [8, 32], strides = [1, 1]} : vector<8x128xf32> to vector<8x32xf32>
    %119 = vector.extract_strided_slice %115 {offsets = [0, 96], sizes = [8, 32], strides = [1, 1]} : vector<8x128xf32> to vector<8x32xf32>
    %120 = arith.mulf %117, %103 : vector<8x32xf32>
    %121 = arith.mulf %116, %118 : vector<8x32xf32>
    %122 = arith.addf %120, %121 : vector<8x32xf32>
    %123 = math.tanh %122 : vector<8x32xf32>
    %124 = arith.mulf %119, %123 : vector<8x32xf32>
    %125 = vector.extract_strided_slice %23 {offsets = [40, 0], sizes = [8, 128], strides = [1, 1]} : vector<64x128xf32> to vector<8x128xf32>
    %cst_27 = arith.constant dense<0.000000e+00> : vector<8x128xf32>
    %126 = tpu.matmul %124, %13, %cst_27 {dimension_numbers = #tpu.dot_dimension_numbers<[1], [0], [0], [1], [0, 0, 1, 1], [], []>} : vector<8x32xf32>, vector<32x128xf32>, vector<8x128xf32> -> vector<8x128xf32>
    %127 = arith.addf %125, %126 : vector<8x128xf32>
    %128 = arith.negf %127 : vector<8x128xf32>
    %129 = math.exp %128 : vector<8x128xf32>
    %cst_28 = arith.constant 1.000000e+00 : f32
    %130 = vector.broadcast %cst_28 : f32 to vector<8x128xf32>
    %131 = arith.addf %130, %129 : vector<8x128xf32>
    %132 = arith.divf %130, %131 : vector<8x128xf32>
    %133 = arith.mulf %132, %8 : vector<8x128xf32>
    %134 = arith.addf %133, %11 : vector<8x128xf32>
    %135 = vector.extract_strided_slice %134 {offsets = [0, 0], sizes = [8, 32], strides = [1, 1]} : vector<8x128xf32> to vector<8x32xf32>
    %136 = vector.extract_strided_slice %134 {offsets = [0, 32], sizes = [8, 32], strides = [1, 1]} : vector<8x128xf32> to vector<8x32xf32>
    %137 = vector.extract_strided_slice %134 {offsets = [0, 64], sizes = [8, 32], strides = [1, 1]} : vector<8x128xf32> to vector<8x32xf32>
    %138 = vector.extract_strided_slice %134 {offsets = [0, 96], sizes = [8, 32], strides = [1, 1]} : vector<8x128xf32> to vector<8x32xf32>
    %139 = arith.mulf %136, %122 : vector<8x32xf32>
    %140 = arith.mulf %135, %137 : vector<8x32xf32>
    %141 = arith.addf %139, %140 : vector<8x32xf32>
    %142 = math.tanh %141 : vector<8x32xf32>
    %143 = arith.mulf %138, %142 : vector<8x32xf32>
    %144 = vector.extract_strided_slice %23 {offsets = [48, 0], sizes = [8, 128], strides = [1, 1]} : vector<64x128xf32> to vector<8x128xf32>
    %cst_29 = arith.constant dense<0.000000e+00> : vector<8x128xf32>
    %145 = tpu.matmul %143, %13, %cst_29 {dimension_numbers = #tpu.dot_dimension_numbers<[1], [0], [0], [1], [0, 0, 1, 1], [], []>} : vector<8x32xf32>, vector<32x128xf32>, vector<8x128xf32> -> vector<8x128xf32>
    %146 = arith.addf %144, %145 : vector<8x128xf32>
    %147 = arith.negf %146 : vector<8x128xf32>
    %148 = math.exp %147 : vector<8x128xf32>
    %cst_30 = arith.constant 1.000000e+00 : f32
    %149 = vector.broadcast %cst_30 : f32 to vector<8x128xf32>
    %150 = arith.addf %149, %148 : vector<8x128xf32>
    %151 = arith.divf %149, %150 : vector<8x128xf32>
    %152 = arith.mulf %151, %8 : vector<8x128xf32>
    %153 = arith.addf %152, %11 : vector<8x128xf32>
    %154 = vector.extract_strided_slice %153 {offsets = [0, 0], sizes = [8, 32], strides = [1, 1]} : vector<8x128xf32> to vector<8x32xf32>
    %155 = vector.extract_strided_slice %153 {offsets = [0, 32], sizes = [8, 32], strides = [1, 1]} : vector<8x128xf32> to vector<8x32xf32>
    %156 = vector.extract_strided_slice %153 {offsets = [0, 64], sizes = [8, 32], strides = [1, 1]} : vector<8x128xf32> to vector<8x32xf32>
    %157 = vector.extract_strided_slice %153 {offsets = [0, 96], sizes = [8, 32], strides = [1, 1]} : vector<8x128xf32> to vector<8x32xf32>
    %158 = arith.mulf %155, %141 : vector<8x32xf32>
    %159 = arith.mulf %154, %156 : vector<8x32xf32>
    %160 = arith.addf %158, %159 : vector<8x32xf32>
    %161 = math.tanh %160 : vector<8x32xf32>
    %162 = arith.mulf %157, %161 : vector<8x32xf32>
    %163 = vector.extract_strided_slice %23 {offsets = [56, 0], sizes = [8, 128], strides = [1, 1]} : vector<64x128xf32> to vector<8x128xf32>
    %cst_31 = arith.constant dense<0.000000e+00> : vector<8x128xf32>
    %164 = tpu.matmul %162, %13, %cst_31 {dimension_numbers = #tpu.dot_dimension_numbers<[1], [0], [0], [1], [0, 0, 1, 1], [], []>} : vector<8x32xf32>, vector<32x128xf32>, vector<8x128xf32> -> vector<8x128xf32>
    %165 = arith.addf %163, %164 : vector<8x128xf32>
    %166 = arith.negf %165 : vector<8x128xf32>
    %167 = math.exp %166 : vector<8x128xf32>
    %cst_32 = arith.constant 1.000000e+00 : f32
    %168 = vector.broadcast %cst_32 : f32 to vector<8x128xf32>
    %169 = arith.addf %168, %167 : vector<8x128xf32>
    %170 = arith.divf %168, %169 : vector<8x128xf32>
    %171 = arith.mulf %170, %8 : vector<8x128xf32>
    %172 = arith.addf %171, %11 : vector<8x128xf32>
    %173 = vector.extract_strided_slice %172 {offsets = [0, 0], sizes = [8, 32], strides = [1, 1]} : vector<8x128xf32> to vector<8x32xf32>
    %174 = vector.extract_strided_slice %172 {offsets = [0, 32], sizes = [8, 32], strides = [1, 1]} : vector<8x128xf32> to vector<8x32xf32>
    %175 = vector.extract_strided_slice %172 {offsets = [0, 64], sizes = [8, 32], strides = [1, 1]} : vector<8x128xf32> to vector<8x32xf32>
    %176 = vector.extract_strided_slice %172 {offsets = [0, 96], sizes = [8, 32], strides = [1, 1]} : vector<8x128xf32> to vector<8x32xf32>
    %177 = arith.mulf %174, %160 : vector<8x32xf32>
    %178 = arith.mulf %173, %175 : vector<8x32xf32>
    %179 = arith.addf %177, %178 : vector<8x32xf32>
    %180 = math.tanh %179 : vector<8x32xf32>
    %181 = arith.mulf %176, %180 : vector<8x32xf32>
    %cst_33 = arith.constant dense<0.000000e+00> : vector<8x128xf32>
    %182 = tpu.matmul %181, %17, %cst_33 {dimension_numbers = #tpu.dot_dimension_numbers<[1], [0], [0], [1], [0, 0, 1, 1], [], []>} : vector<8x32xf32>, vector<32x128xf32>, vector<8x128xf32> -> vector<8x128xf32>
    %183 = arith.addf %27, %182 : vector<8x128xf32>
    %184 = arith.negf %183 : vector<8x128xf32>
    %185 = math.exp %184 : vector<8x128xf32>
    %cst_34 = arith.constant 1.000000e+00 : f32
    %186 = vector.broadcast %cst_34 : f32 to vector<8x128xf32>
    %187 = arith.addf %186, %185 : vector<8x128xf32>
    %188 = arith.divf %186, %187 : vector<8x128xf32>
    %189 = arith.mulf %188, %8 : vector<8x128xf32>
    %190 = arith.addf %189, %11 : vector<8x128xf32>
    %191 = vector.extract_strided_slice %190 {offsets = [0, 0], sizes = [8, 32], strides = [1, 1]} : vector<8x128xf32> to vector<8x32xf32>
    %192 = vector.extract_strided_slice %190 {offsets = [0, 32], sizes = [8, 32], strides = [1, 1]} : vector<8x128xf32> to vector<8x32xf32>
    %193 = vector.extract_strided_slice %190 {offsets = [0, 64], sizes = [8, 32], strides = [1, 1]} : vector<8x128xf32> to vector<8x32xf32>
    %194 = vector.extract_strided_slice %190 {offsets = [0, 96], sizes = [8, 32], strides = [1, 1]} : vector<8x128xf32> to vector<8x32xf32>
    %195 = arith.mulf %192, %179 : vector<8x32xf32>
    %196 = arith.mulf %191, %193 : vector<8x32xf32>
    %197 = arith.addf %195, %196 : vector<8x32xf32>
    %198 = math.tanh %197 : vector<8x32xf32>
    %199 = arith.mulf %194, %198 : vector<8x32xf32>
    %cst_35 = arith.constant dense<0.000000e+00> : vector<8x128xf32>
    %200 = tpu.matmul %199, %18, %cst_35 {dimension_numbers = #tpu.dot_dimension_numbers<[1], [0], [0], [1], [0, 0, 1, 1], [], []>} : vector<8x32xf32>, vector<32x128xf32>, vector<8x128xf32> -> vector<8x128xf32>
    %201 = vector.broadcast %19 : vector<1x128xf32> to vector<8x128xf32>
    %202 = arith.addf %200, %201 : vector<8x128xf32>
    %203 = arith.negf %202 : vector<8x128xf32>
    %204 = math.exp %203 : vector<8x128xf32>
    %cst_36 = arith.constant 1.000000e+00 : f32
    %205 = vector.broadcast %cst_36 : f32 to vector<8x128xf32>
    %206 = arith.addf %205, %204 : vector<8x128xf32>
    %207 = arith.divf %205, %206 : vector<8x128xf32>
    %208 = arith.mulf %207, %8 : vector<8x128xf32>
    %209 = arith.addf %208, %11 : vector<8x128xf32>
    %210 = vector.extract_strided_slice %209 {offsets = [0, 0], sizes = [8, 32], strides = [1, 1]} : vector<8x128xf32> to vector<8x32xf32>
    %211 = vector.extract_strided_slice %209 {offsets = [0, 32], sizes = [8, 32], strides = [1, 1]} : vector<8x128xf32> to vector<8x32xf32>
    %212 = vector.extract_strided_slice %209 {offsets = [0, 64], sizes = [8, 32], strides = [1, 1]} : vector<8x128xf32> to vector<8x32xf32>
    %213 = vector.extract_strided_slice %209 {offsets = [0, 96], sizes = [8, 32], strides = [1, 1]} : vector<8x128xf32> to vector<8x32xf32>
    %214 = arith.mulf %211, %197 : vector<8x32xf32>
    %215 = arith.mulf %210, %212 : vector<8x32xf32>
    %216 = arith.addf %214, %215 : vector<8x32xf32>
    %217 = math.tanh %216 : vector<8x32xf32>
    %218 = arith.mulf %213, %217 : vector<8x32xf32>
    %cst_37 = arith.constant dense<0.000000e+00> : vector<8x128xf32>
    %219 = tpu.matmul %218, %18, %cst_37 {dimension_numbers = #tpu.dot_dimension_numbers<[1], [0], [0], [1], [0, 0, 1, 1], [], []>} : vector<8x32xf32>, vector<32x128xf32>, vector<8x128xf32> -> vector<8x128xf32>
    %220 = vector.broadcast %19 : vector<1x128xf32> to vector<8x128xf32>
    %221 = arith.addf %219, %220 : vector<8x128xf32>
    %222 = arith.negf %221 : vector<8x128xf32>
    %223 = math.exp %222 : vector<8x128xf32>
    %cst_38 = arith.constant 1.000000e+00 : f32
    %224 = vector.broadcast %cst_38 : f32 to vector<8x128xf32>
    %225 = arith.addf %224, %223 : vector<8x128xf32>
    %226 = arith.divf %224, %225 : vector<8x128xf32>
    %227 = arith.mulf %226, %8 : vector<8x128xf32>
    %228 = arith.addf %227, %11 : vector<8x128xf32>
    %229 = vector.extract_strided_slice %228 {offsets = [0, 0], sizes = [8, 32], strides = [1, 1]} : vector<8x128xf32> to vector<8x32xf32>
    %230 = vector.extract_strided_slice %228 {offsets = [0, 32], sizes = [8, 32], strides = [1, 1]} : vector<8x128xf32> to vector<8x32xf32>
    %231 = vector.extract_strided_slice %228 {offsets = [0, 64], sizes = [8, 32], strides = [1, 1]} : vector<8x128xf32> to vector<8x32xf32>
    %232 = vector.extract_strided_slice %228 {offsets = [0, 96], sizes = [8, 32], strides = [1, 1]} : vector<8x128xf32> to vector<8x32xf32>
    %233 = arith.mulf %230, %216 : vector<8x32xf32>
    %234 = arith.mulf %229, %231 : vector<8x32xf32>
    %235 = arith.addf %233, %234 : vector<8x32xf32>
    %236 = math.tanh %235 : vector<8x32xf32>
    %237 = arith.mulf %232, %236 : vector<8x32xf32>
    %cst_39 = arith.constant dense<0.000000e+00> : vector<8x128xf32>
    %238 = tpu.matmul %237, %18, %cst_39 {dimension_numbers = #tpu.dot_dimension_numbers<[1], [0], [0], [1], [0, 0, 1, 1], [], []>} : vector<8x32xf32>, vector<32x128xf32>, vector<8x128xf32> -> vector<8x128xf32>
    %239 = vector.broadcast %19 : vector<1x128xf32> to vector<8x128xf32>
    %240 = arith.addf %238, %239 : vector<8x128xf32>
    %241 = arith.negf %240 : vector<8x128xf32>
    %242 = math.exp %241 : vector<8x128xf32>
    %cst_40 = arith.constant 1.000000e+00 : f32
    %243 = vector.broadcast %cst_40 : f32 to vector<8x128xf32>
    %244 = arith.addf %243, %242 : vector<8x128xf32>
    %245 = arith.divf %243, %244 : vector<8x128xf32>
    %246 = arith.mulf %245, %8 : vector<8x128xf32>
    %247 = arith.addf %246, %11 : vector<8x128xf32>
    %248 = vector.extract_strided_slice %247 {offsets = [0, 0], sizes = [8, 32], strides = [1, 1]} : vector<8x128xf32> to vector<8x32xf32>
    %249 = vector.extract_strided_slice %247 {offsets = [0, 32], sizes = [8, 32], strides = [1, 1]} : vector<8x128xf32> to vector<8x32xf32>
    %250 = vector.extract_strided_slice %247 {offsets = [0, 64], sizes = [8, 32], strides = [1, 1]} : vector<8x128xf32> to vector<8x32xf32>
    %251 = vector.extract_strided_slice %247 {offsets = [0, 96], sizes = [8, 32], strides = [1, 1]} : vector<8x128xf32> to vector<8x32xf32>
    %252 = arith.mulf %249, %235 : vector<8x32xf32>
    %253 = arith.mulf %248, %250 : vector<8x32xf32>
    %254 = arith.addf %252, %253 : vector<8x32xf32>
    %255 = math.tanh %254 : vector<8x32xf32>
    %256 = arith.mulf %251, %255 : vector<8x32xf32>
    %cst_41 = arith.constant dense<0.000000e+00> : vector<8x128xf32>
    %257 = tpu.matmul %256, %18, %cst_41 {dimension_numbers = #tpu.dot_dimension_numbers<[1], [0], [0], [1], [0, 0, 1, 1], [], []>} : vector<8x32xf32>, vector<32x128xf32>, vector<8x128xf32> -> vector<8x128xf32>
    %258 = vector.broadcast %19 : vector<1x128xf32> to vector<8x128xf32>
    %259 = arith.addf %257, %258 : vector<8x128xf32>
    %260 = arith.negf %259 : vector<8x128xf32>
    %261 = math.exp %260 : vector<8x128xf32>
    %cst_42 = arith.constant 1.000000e+00 : f32
    %262 = vector.broadcast %cst_42 : f32 to vector<8x128xf32>
    %263 = arith.addf %262, %261 : vector<8x128xf32>
    %264 = arith.divf %262, %263 : vector<8x128xf32>
    %265 = arith.mulf %264, %8 : vector<8x128xf32>
    %266 = arith.addf %265, %11 : vector<8x128xf32>
    %267 = vector.extract_strided_slice %266 {offsets = [0, 0], sizes = [8, 32], strides = [1, 1]} : vector<8x128xf32> to vector<8x32xf32>
    %268 = vector.extract_strided_slice %266 {offsets = [0, 32], sizes = [8, 32], strides = [1, 1]} : vector<8x128xf32> to vector<8x32xf32>
    %269 = vector.extract_strided_slice %266 {offsets = [0, 64], sizes = [8, 32], strides = [1, 1]} : vector<8x128xf32> to vector<8x32xf32>
    %270 = vector.extract_strided_slice %266 {offsets = [0, 96], sizes = [8, 32], strides = [1, 1]} : vector<8x128xf32> to vector<8x32xf32>
    %271 = arith.mulf %268, %254 : vector<8x32xf32>
    %272 = arith.mulf %267, %269 : vector<8x32xf32>
    %273 = arith.addf %271, %272 : vector<8x32xf32>
    %274 = math.tanh %273 : vector<8x32xf32>
    %275 = arith.mulf %270, %274 : vector<8x32xf32>
    %cst_43 = arith.constant dense<0.000000e+00> : vector<8x128xf32>
    %276 = tpu.matmul %275, %18, %cst_43 {dimension_numbers = #tpu.dot_dimension_numbers<[1], [0], [0], [1], [0, 0, 1, 1], [], []>} : vector<8x32xf32>, vector<32x128xf32>, vector<8x128xf32> -> vector<8x128xf32>
    %277 = vector.broadcast %19 : vector<1x128xf32> to vector<8x128xf32>
    %278 = arith.addf %276, %277 : vector<8x128xf32>
    %279 = arith.negf %278 : vector<8x128xf32>
    %280 = math.exp %279 : vector<8x128xf32>
    %cst_44 = arith.constant 1.000000e+00 : f32
    %281 = vector.broadcast %cst_44 : f32 to vector<8x128xf32>
    %282 = arith.addf %281, %280 : vector<8x128xf32>
    %283 = arith.divf %281, %282 : vector<8x128xf32>
    %284 = arith.mulf %283, %8 : vector<8x128xf32>
    %285 = arith.addf %284, %11 : vector<8x128xf32>
    %286 = vector.extract_strided_slice %285 {offsets = [0, 0], sizes = [8, 32], strides = [1, 1]} : vector<8x128xf32> to vector<8x32xf32>
    %287 = vector.extract_strided_slice %285 {offsets = [0, 32], sizes = [8, 32], strides = [1, 1]} : vector<8x128xf32> to vector<8x32xf32>
    %288 = vector.extract_strided_slice %285 {offsets = [0, 64], sizes = [8, 32], strides = [1, 1]} : vector<8x128xf32> to vector<8x32xf32>
    %289 = vector.extract_strided_slice %285 {offsets = [0, 96], sizes = [8, 32], strides = [1, 1]} : vector<8x128xf32> to vector<8x32xf32>
    %290 = arith.mulf %287, %273 : vector<8x32xf32>
    %291 = arith.mulf %286, %288 : vector<8x32xf32>
    %292 = arith.addf %290, %291 : vector<8x32xf32>
    %293 = math.tanh %292 : vector<8x32xf32>
    %294 = arith.mulf %289, %293 : vector<8x32xf32>
    %cst_45 = arith.constant dense<0.000000e+00> : vector<8x128xf32>
    %295 = tpu.matmul %294, %18, %cst_45 {dimension_numbers = #tpu.dot_dimension_numbers<[1], [0], [0], [1], [0, 0, 1, 1], [], []>} : vector<8x32xf32>, vector<32x128xf32>, vector<8x128xf32> -> vector<8x128xf32>
    %296 = vector.broadcast %19 : vector<1x128xf32> to vector<8x128xf32>
    %297 = arith.addf %295, %296 : vector<8x128xf32>
    %298 = arith.negf %297 : vector<8x128xf32>
    %299 = math.exp %298 : vector<8x128xf32>
    %cst_46 = arith.constant 1.000000e+00 : f32
    %300 = vector.broadcast %cst_46 : f32 to vector<8x128xf32>
    %301 = arith.addf %300, %299 : vector<8x128xf32>
    %302 = arith.divf %300, %301 : vector<8x128xf32>
    %303 = arith.mulf %302, %8 : vector<8x128xf32>
    %304 = arith.addf %303, %11 : vector<8x128xf32>
    %305 = vector.extract_strided_slice %304 {offsets = [0, 0], sizes = [8, 32], strides = [1, 1]} : vector<8x128xf32> to vector<8x32xf32>
    %306 = vector.extract_strided_slice %304 {offsets = [0, 32], sizes = [8, 32], strides = [1, 1]} : vector<8x128xf32> to vector<8x32xf32>
    %307 = vector.extract_strided_slice %304 {offsets = [0, 64], sizes = [8, 32], strides = [1, 1]} : vector<8x128xf32> to vector<8x32xf32>
    %308 = vector.extract_strided_slice %304 {offsets = [0, 96], sizes = [8, 32], strides = [1, 1]} : vector<8x128xf32> to vector<8x32xf32>
    %309 = arith.mulf %306, %292 : vector<8x32xf32>
    %310 = arith.mulf %305, %307 : vector<8x32xf32>
    %311 = arith.addf %309, %310 : vector<8x32xf32>
    %312 = math.tanh %311 : vector<8x32xf32>
    %313 = arith.mulf %308, %312 : vector<8x32xf32>
    %cst_47 = arith.constant dense<0.000000e+00> : vector<8x128xf32>
    %314 = tpu.matmul %313, %18, %cst_47 {dimension_numbers = #tpu.dot_dimension_numbers<[1], [0], [0], [1], [0, 0, 1, 1], [], []>} : vector<8x32xf32>, vector<32x128xf32>, vector<8x128xf32> -> vector<8x128xf32>
    %315 = vector.broadcast %19 : vector<1x128xf32> to vector<8x128xf32>
    %316 = arith.addf %314, %315 : vector<8x128xf32>
    %317 = arith.negf %316 : vector<8x128xf32>
    %318 = math.exp %317 : vector<8x128xf32>
    %cst_48 = arith.constant 1.000000e+00 : f32
    %319 = vector.broadcast %cst_48 : f32 to vector<8x128xf32>
    %320 = arith.addf %319, %318 : vector<8x128xf32>
    %321 = arith.divf %319, %320 : vector<8x128xf32>
    %322 = arith.mulf %321, %8 : vector<8x128xf32>
    %323 = arith.addf %322, %11 : vector<8x128xf32>
    %324 = vector.extract_strided_slice %323 {offsets = [0, 0], sizes = [8, 32], strides = [1, 1]} : vector<8x128xf32> to vector<8x32xf32>
    %325 = vector.extract_strided_slice %323 {offsets = [0, 32], sizes = [8, 32], strides = [1, 1]} : vector<8x128xf32> to vector<8x32xf32>
    %326 = vector.extract_strided_slice %323 {offsets = [0, 64], sizes = [8, 32], strides = [1, 1]} : vector<8x128xf32> to vector<8x32xf32>
    %327 = vector.extract_strided_slice %323 {offsets = [0, 96], sizes = [8, 32], strides = [1, 1]} : vector<8x128xf32> to vector<8x32xf32>
    %328 = arith.mulf %325, %311 : vector<8x32xf32>
    %329 = arith.mulf %324, %326 : vector<8x32xf32>
    %330 = arith.addf %328, %329 : vector<8x32xf32>
    %331 = math.tanh %330 : vector<8x32xf32>
    %332 = arith.mulf %327, %331 : vector<8x32xf32>
    %333 = tpu.concatenate %199, %218, %237, %256, %275, %294, %313, %332 in 0 : vector<8x32xf32>, vector<8x32xf32>, vector<8x32xf32>, vector<8x32xf32>, vector<8x32xf32>, vector<8x32xf32>, vector<8x32xf32>, vector<8x32xf32> -> vector<64x32xf32>
    %c136 = arith.constant 136 : index
    %c0_49 = arith.constant 0 : index
    %334 = vector.load %arg1[%c136, %c0_49] : memref<176x128xf32, #tpu.memory_space<vmem>>, vector<32x128xf32>
    %c168 = arith.constant 168 : index
    %c0_50 = arith.constant 0 : index
    %335 = vector.load %arg1[%c168, %c0_50] : memref<176x128xf32, #tpu.memory_space<vmem>>, vector<1x128xf32>
    %cst_51 = arith.constant dense<0.000000e+00> : vector<64x128xf32>
    %336 = tpu.matmul %333, %334, %cst_51 {dimension_numbers = #tpu.dot_dimension_numbers<[1], [0], [0], [1], [0, 0, 1, 1], [], []>} : vector<64x32xf32>, vector<32x128xf32>, vector<64x128xf32> -> vector<64x128xf32>
    %337 = vector.broadcast %335 : vector<1x128xf32> to vector<64x128xf32>
    %338 = arith.addf %336, %337 : vector<64x128xf32>
    %c0_52 = arith.constant 0 : index
    %c0_53 = arith.constant 0 : index
    %339 = vector.load %arg2[%c0_52, %c0_53] : memref<64x128xf32, #tpu.memory_space<vmem>>, vector<64x128xf32>
    tpu.vector_store %arg2[%c0_52, %c0_53], %338 {strides = array<i32>} : memref<64x128xf32, #tpu.memory_space<vmem>>, vector<64x128xf32>,
    return
  }
}

</mosaic_0001>

<llo_original>
// kernel: tpu_custom_call.1
$region0: #{tpu_custom_call.1}
  #allocation0 [shape = 'u32[]', space=smem, size = 0x4, offset = 0x4, fixed_abs, tag = 'smem constant byte address 0x4 - core index']
  #allocation1 [shape = 'u32[144,128]{1,0:T(1,128)}', space=vmem, size = 0x12000, scoped, tag = 'internal scratch']
  %s0 = inlined_call_operand.vmem [shape: f32[64,4], index: 0, kind: input, shape index: {}]
  %s1 = inlined_call_operand.hbm [shape: f32[176,128], index: 1, kind: input, shape index: {}]
  %s2 = inlined_call_operand.hbm [shape: f32[64,128], index: 2, kind: output, shape index: {}]
  %s3 = sld [smem:[#allocation0]]
  $region22: #{tpu_custom_call.1} parent=0
    _
  %s5 = ssub.s32 1, %s3
  %s6 = scalar_select 0, %s5, %s3
  $region1: #{tpu_custom_call.1} parent=0
    #allocation2 [shape = 'u8[90112]{0}', space=vmem, size = 0x16000, scoped, tag = 'input window, operand 1, single buffered']
    #allocation3 [shape = 's32[1]{0}', space=sflag, size = 0x4, scoped, tag = 'scoped memory for tpu_custom_call.1']
    #allocation4 [shape = 's32[1]{0}', space=sflag, size = 0x4, scoped, tag = 'scoped memory for tpu_custom_call.1']
    #allocation5 [shape = 'u8[32768]{0}', space=vmem, size = 0x8000, scoped, tag = 'output window, operand 0, single buffered']
    %7 = vsyncpa [#allocation3], 0
    %8 = vsyncpa [#allocation4], 0
    // Predicated region
    $region2: #{tpu_custom_call.1} parent=1 // pred_check
      _
    $region3: #{tpu_custom_call.1} parent=1 // pred_check_branch
      %10 = sbr.rel (0) target = $region5
    $region4: #{tpu_custom_call.1} parent=1 // pred_region
      _
    $region5: #{tpu_custom_call.1} parent=1 // pred_fallthru
      _
    // Predicated region
    $region6: #{tpu_custom_call.1} parent=1 // pred_check
      _
    $region7: #{tpu_custom_call.1} parent=1 // pred_check_branch
      %12 = sbr.rel (0) target = $region9
    $region8: #{tpu_custom_call.1} parent=1 // pred_region
      %s14 = ssub.s32 2816, 2816
      %15 = vsyncadd [#allocation3], %s14
      %s16 = sshll.u32 [#allocation2], 4
      %s17 = int_to_ptr.vmem [resolvable:$true] %s16
      %22 = dma.hbm_to_vmem [thread:$0]  %s1, 2816, %s17, [#allocation3], 128, 128, 8
    $region9: #{tpu_custom_call.1} parent=1 // pred_fallthru
      _
    // Predicated region
    $region10: #{tpu_custom_call.1} parent=1 // pred_check
      _
    $region11: #{tpu_custom_call.1} parent=1 // pred_check_branch
      %24 = sbr.rel (0) target = $region13
    $region12: #{tpu_custom_call.1} parent=1 // pred_region
      %25 = dma.done [#allocation3], 2816
    $region13: #{tpu_custom_call.1} parent=1 // pred_fallthru
      _
    %v26 = vlaneseq
    %v27 = vand.u32 %v26, 127
    %vm28 = vcmp.ge.s32.totalorder %v27, 64
    %vm29 = vcmp.lt.s32.totalorder %v27, 96
    %vm30 = vmand %vm28, %vm29
    %v31 = vsel %vm30, 2.0, 1.0
    %v32 = vsel %vm30, -1.0, 0.0
    %v33 = vld [vmem:[#allocation2] sm:$0xf]
    %v34 = vld [vmem:[#allocation2 + $0x8] sm:$0xff]
    %v35 = vld [vmem:[#allocation2 + $0x10] sm:$0xff]
    %v36 = vld [vmem:[#allocation2 + $0x18] sm:$0xff]
    %v37 = vld [vmem:[#allocation2 + $0x20] sm:$0xff]
    %v38 = vld [vmem:[#allocation2 + $0x28] sm:$0x1]
    %v39 = vld [vmem:[#allocation2 + $0x30] sm:$0xf]
    %v40 = vld [vmem:[#allocation2 + $0x38] sm:$0x1]
    %v41 = vld [vmem:[#allocation2 + $0x40] sm:$0xff]
    %v42 = vld [vmem:[#allocation2 + $0x48] sm:$0xff]
    %v43 = vld [vmem:[#allocation2 + $0x50] sm:$0xff]
    %v44 = vld [vmem:[#allocation2 + $0x58] sm:$0xff]
    %v45 = vld [vmem:[#allocation2 + $0x60] sm:$0xff]
    %v46 = vld [vmem:[#allocation2 + $0x68] sm:$0xff]
    %v47 = vld [vmem:[#allocation2 + $0x70] sm:$0xff]
    %v48 = vld [vmem:[#allocation2 + $0x78] sm:$0xff]
    %v49 = vld [vmem:[#allocation2 + $0x80] sm:$0x1]
    %v50 = vld [vmem:[%s0] sm:$0xff]
    %v51 = vld [vmem:[%s0 + $0x8] sm:$0xff]
    %v52 = vld [vmem:[%s0 + $0x10] sm:$0xff]
    %v53 = vld [vmem:[%s0 + $0x18] sm:$0xff]
    %v54 = vld [vmem:[%s0 + $0x20] sm:$0xff]
    %v55 = vld [vmem:[%s0 + $0x28] sm:$0xff]
    %v56 = vld [vmem:[%s0 + $0x30] sm:$0xff]
    %v57 = vld [vmem:[%s0 + $0x38] sm:$0xff]
    %v58 = vlaneseq
    %v59 = vshrl.u32 %v58, 7
    %v60 = vsub.s32 0, %v59
    %v61 = vrot.slane %v38, %v60
    %vm62 = vcmask 31744
    %v64 = vsel %vm62, %v50, 0
    %v67 = vsel %vm62, %v51, 0
    %v70 = vsel %vm62, %v52, 0
    %v73 = vsel %vm62, %v53, 0
    %v76 = vsel %vm62, %v54, 0
    %v79 = vsel %vm62, %v55, 0
    %v82 = vsel %vm62, %v56, 0
    %v85 = vsel %vm62, %v57, 0
    %vm87 = vcmask 1043456
    %v89 = vsel %vm87, %v33, 0
    %91 = vmatprep.subr.mxu0 0.0
    %92 = vmatpush1.msra.mxu0 %v89
    %93 = vmatprep.subr.mxu0 0.0
    %94 = vmatpush1.msra.mxu0 0.0
    %95 = vmatprep.subr.mxu0 0.0
    %96 = vmatpush1.msra.mxu0 0.0
    %97 = vmatprep.subr.mxu0 0.0
    %98 = vmatpush1.msra.mxu0 0.0
    %99 = vmatprep.subr.mxu0 0.0
    %100 = vmatpush1.msra.mxu0 0.0
    %101 = vmatprep.subr.mxu0 0.0
    %102 = vmatpush1.msra.mxu0 0.0
    %103 = vmatprep.subr.mxu0 0.0
    %104 = vmatpush1.msra.mxu0 0.0
    %105 = vmatprep.subr.mxu0 0.0
    %106 = vmatpush1.msra.mxu0 0.0
    %107 = vmatprep.subr.mxu0 0.0
    %108 = vmatpush1.msra.mxu0 0.0
    %109 = vmatprep.subr.mxu0 0.0
    %110 = vmatpush1.msra.mxu0 0.0
    %111 = vmatprep.subr.mxu0 0.0
    %112 = vmatpush1.msra.mxu0 0.0
    %113 = vmatprep.subr.mxu0 0.0
    %114 = vmatpush1.msra.mxu0 0.0
    %115 = vmatprep.subr.mxu0 0.0
    %116 = vmatpush1.msra.mxu0 0.0
    %117 = vmatprep.subr.mxu0 0.0
    %118 = vmatpush1.msra.mxu0 0.0
    %119 = vmatprep.subr.mxu0 0.0
    %120 = vmatpush1.msra.mxu0 0.0
    %121 = vmatprep.subr.mxu0 0.0
    %122 = vmatpush1.msra.mxu0 0.0
    %123 = vmatprep.subr.mxu0 0.0
    %124 = vmatpush1.msra.mxu0 0.0
    %125 = vmatprep.subr.mxu0 0.0
    %126 = vmatpush1.msra.mxu0 0.0
    %127 = vmatprep.subr.mxu0 0.0
    %128 = vmatpush1.msra.mxu0 0.0
    %129 = vmatprep.subr.mxu0 0.0
    %130 = vmatpush1.msra.mxu0 0.0
    %131 = vmatprep.subr.mxu0 0.0
    %132 = vmatpush1.msra.mxu0 0.0
    %133 = vmatprep.subr.mxu0 0.0
    %134 = vmatpush1.msra.mxu0 0.0
    %135 = vmatprep.subr.mxu0 0.0
    %136 = vmatpush1.msra.mxu0 0.0
    %137 = vmatprep.subr.mxu0 0.0
    %138 = vmatpush1.msra.mxu0 0.0
    %139 = vmatprep.subr.mxu0 0.0
    %140 = vmatpush1.msra.mxu0 0.0
    %141 = vmatprep.subr.mxu0 0.0
    %142 = vmatpush1.msra.mxu0 0.0
    %143 = vmatprep.subr.mxu0 0.0
    %144 = vmatpush1.msra.mxu0 0.0
    %145 = vmatprep.subr.mxu0 0.0
    %146 = vmatpush1.msra.mxu0 0.0
    %147 = vmatprep.subr.mxu0 0.0
    %148 = vmatpush1.msra.mxu0 0.0
    %149 = vmatprep.subr.mxu0 0.0
    %150 = vmatpush1.msra.mxu0 0.0
    %151 = vmatprep.subr.mxu0 0.0
    %152 = vmatpush1.msra.mxu0 0.0
    %153 = vmatprep.subr.mxu0 0.0
    %154 = vmatpush1.msra.mxu0 0.0
    %155 = vmatprep.mubr.f32.mxu0 0.0
    %156 = vmatmul.mubr.f32.gmra.mrb[0].mxu0 %v64
    %v157 = vpop.f32.mrb[0].mxu0
    %v158 = vadd.f32 %v61, %v157
    %v159 = vpop.f32.mrb[0].mxu0
    %160 = vmatprep.mubr.f32.mxu0 0.0
    %161 = vmatmul.mubr.f32.gmra.mrb[0].mxu0 %v67
    %v162 = vpop.f32.mrb[0].mxu0
    %v163 = vadd.f32 %v61, %v162
    %v164 = vpop.f32.mrb[0].mxu0
    %165 = vmatprep.mubr.f32.mxu0 0.0
    %166 = vmatmul.mubr.f32.gmra.mrb[0].mxu0 %v70
    %v167 = vpop.f32.mrb[0].mxu0
    %v168 = vadd.f32 %v61, %v167
    %v169 = vpop.f32.mrb[0].mxu0
    %170 = vmatprep.mubr.f32.mxu0 0.0
    %171 = vmatmul.mubr.f32.gmra.mrb[0].mxu0 %v73
    %v172 = vpop.f32.mrb[0].mxu0
    %v173 = vadd.f32 %v61, %v172
    %v174 = vpop.f32.mrb[0].mxu0
    %175 = vmatprep.mubr.f32.mxu0 0.0
    %176 = vmatmul.mubr.f32.gmra.mrb[0].mxu0 %v76
    %v177 = vpop.f32.mrb[0].mxu0
    %v178 = vadd.f32 %v61, %v177
    %v179 = vpop.f32.mrb[0].mxu0
    %180 = vmatprep.mubr.f32.mxu0 0.0
    %181 = vmatmul.mubr.f32.gmra.mrb[0].mxu0 %v79
    %v182 = vpop.f32.mrb[0].mxu0
    %v183 = vadd.f32 %v61, %v182
    %v184 = vpop.f32.mrb[0].mxu0
    %185 = vmatprep.mubr.f32.mxu0 0.0
    %186 = vmatmul.mubr.f32.gmra.mrb[0].mxu0 %v82
    %v187 = vpop.f32.mrb[0].mxu0
    %v188 = vadd.f32 %v61, %v187
    %v189 = vpop.f32.mrb[0].mxu0
    %190 = vmatprep.mubr.f32.mxu0 0.0
    %191 = vmatmul.mubr.f32.gmra.mrb[0].mxu0 %v85
    %v192 = vpop.f32.mrb[0].mxu0
    %v193 = vadd.f32 %v61, %v192
    %v194 = vpop.f32.mrb[0].mxu0
    %195 = vdwg.mxu0
    %v196 = vlaneseq
    %v197 = vshrl.u32 %v196, 7
    %v198 = vsub.s32 0, %v197
    %v199 = vrot.slane %v40, %v198
    %v201 = vsel %vm87, %v39, 0
    %203 = vmatprep.subr.mxu0 0.0
    %204 = vmatpush1.msra.mxu0 %v201
    %205 = vmatprep.subr.mxu0 0.0
    %206 = vmatpush1.msra.mxu0 0.0
    %207 = vmatprep.subr.mxu0 0.0
    %208 = vmatpush1.msra.mxu0 0.0
    %209 = vmatprep.subr.mxu0 0.0
    %210 = vmatpush1.msra.mxu0 0.0
    %211 = vmatprep.subr.mxu0 0.0
    %212 = vmatpush1.msra.mxu0 0.0
    %213 = vmatprep.subr.mxu0 0.0
    %214 = vmatpush1.msra.mxu0 0.0
    %215 = vmatprep.subr.mxu0 0.0
    %216 = vmatpush1.msra.mxu0 0.0
    %217 = vmatprep.subr.mxu0 0.0
    %218 = vmatpush1.msra.mxu0 0.0
    %219 = vmatprep.subr.mxu0 0.0
    %220 = vmatpush1.msra.mxu0 0.0
    %221 = vmatprep.subr.mxu0 0.0
    %222 = vmatpush1.msra.mxu0 0.0
    %223 = vmatprep.subr.mxu0 0.0
    %224 = vmatpush1.msra.mxu0 0.0
    %225 = vmatprep.subr.mxu0 0.0
    %226 = vmatpush1.msra.mxu0 0.0
    %227 = vmatprep.subr.mxu0 0.0
    %228 = vmatpush1.msra.mxu0 0.0
    %229 = vmatprep.subr.mxu0 0.0
    %230 = vmatpush1.msra.mxu0 0.0
    %231 = vmatprep.subr.mxu0 0.0
    %232 = vmatpush1.msra.mxu0 0.0
    %233 = vmatprep.subr.mxu0 0.0
    %234 = vmatpush1.msra.mxu0 0.0
    %235 = vmatprep.subr.mxu0 0.0
    %236 = vmatpush1.msra.mxu0 0.0
    %237 = vmatprep.subr.mxu0 0.0
    %238 = vmatpush1.msra.mxu0 0.0
    %239 = vmatprep.subr.mxu0 0.0
    %240 = vmatpush1.msra.mxu0 0.0
    %241 = vmatprep.subr.mxu0 0.0
    %242 = vmatpush1.msra.mxu0 0.0
    %243 = vmatprep.subr.mxu0 0.0
    %244 = vmatpush1.msra.mxu0 0.0
    %245 = vmatprep.subr.mxu0 0.0
    %246 = vmatpush1.msra.mxu0 0.0
    %247 = vmatprep.subr.mxu0 0.0
    %248 = vmatpush1.msra.mxu0 0.0
    %249 = vmatprep.subr.mxu0 0.0
    %250 = vmatpush1.msra.mxu0 0.0
    %251 = vmatprep.subr.mxu0 0.0
    %252 = vmatpush1.msra.mxu0 0.0
    %253 = vmatprep.subr.mxu0 0.0
    %254 = vmatpush1.msra.mxu0 0.0
    %255 = vmatprep.subr.mxu0 0.0
    %256 = vmatpush1.msra.mxu0 0.0
    %257 = vmatprep.subr.mxu0 0.0
    %258 = vmatpush1.msra.mxu0 0.0
    %259 = vmatprep.subr.mxu0 0.0
    %260 = vmatpush1.msra.mxu0 0.0
    %261 = vmatprep.subr.mxu0 0.0
    %262 = vmatpush1.msra.mxu0 0.0
    %263 = vmatprep.subr.mxu0 0.0
    %264 = vmatpush1.msra.mxu0 0.0
    %265 = vmatprep.subr.mxu0 0.0
    %266 = vmatpush1.msra.mxu0 0.0
    %267 = vmatprep.mubr.f32.mxu0 0.0
    %268 = vmatmul.mubr.f32.gmra.mrb[0].mxu0 %v85
    %v269 = vpop.f32.mrb[0].mxu0
    %v270 = vadd.f32 %v199, %v269
    %v271 = vpop.f32.mrb[0].mxu0
    %272 = vdwg.mxu0
    %vm273 = vcmask 261120
    %v275 = vsel %vm273, 0.0, 0
    %277 = vmatprep.subr.mxu0 0.0
    %278 = vmatpush1.msra.mxu0 %v34
    %279 = vmatprep.subr.mxu0 0.0
    %280 = vmatpush1.msra.mxu0 %v35
    %281 = vmatprep.subr.mxu0 0.0
    %282 = vmatpush1.msra.mxu0 %v36
    %283 = vmatprep.subr.mxu0 0.0
    %284 = vmatpush1.msra.mxu0 %v37
    %285 = vmatprep.subr.mxu0 0.0
    %286 = vmatpush1.msra.mxu0 0.0
    %287 = vmatprep.subr.mxu0 0.0
    %288 = vmatpush1.msra.mxu0 0.0
    %289 = vmatprep.subr.mxu0 0.0
    %290 = vmatpush1.msra.mxu0 0.0
    %291 = vmatprep.subr.mxu0 0.0
    %292 = vmatpush1.msra.mxu0 0.0
    %293 = vmatprep.subr.mxu0 0.0
    %294 = vmatpush1.msra.mxu0 0.0
    %295 = vmatprep.subr.mxu0 0.0
    %296 = vmatpush1.msra.mxu0 0.0
    %297 = vmatprep.subr.mxu0 0.0
    %298 = vmatpush1.msra.mxu0 0.0
    %299 = vmatprep.subr.mxu0 0.0
    %300 = vmatpush1.msra.mxu0 0.0
    %301 = vmatprep.subr.mxu0 0.0
    %302 = vmatpush1.msra.mxu0 0.0
    %303 = vmatprep.subr.mxu0 0.0
    %304 = vmatpush1.msra.mxu0 0.0
    %305 = vmatprep.subr.mxu0 0.0
    %306 = vmatpush1.msra.mxu0 0.0
    %307 = vmatprep.subr.mxu0 0.0
    %308 = vmatpush1.msra.mxu0 0.0
    %309 = vmatprep.subr.mxu0 0.0
    %310 = vmatpush1.msra.mxu0 0.0
    %311 = vmatprep.subr.mxu0 0.0
    %312 = vmatpush1.msra.mxu0 0.0
    %313 = vmatprep.subr.mxu0 0.0
    %314 = vmatpush1.msra.mxu0 0.0
    %315 = vmatprep.subr.mxu0 0.0
    %316 = vmatpush1.msra.mxu0 0.0
    %317 = vmatprep.subr.mxu0 0.0
    %318 = vmatpush1.msra.mxu0 0.0
    %319 = vmatprep.subr.mxu0 0.0
    %320 = vmatpush1.msra.mxu0 0.0
    %321 = vmatprep.subr.mxu0 0.0
    %322 = vmatpush1.msra.mxu0 0.0
    %323 = vmatprep.subr.mxu0 0.0
    %324 = vmatpush1.msra.mxu0 0.0
    %325 = vmatprep.subr.mxu0 0.0
    %326 = vmatpush1.msra.mxu0 0.0
    %327 = vmatprep.subr.mxu0 0.0
    %328 = vmatpush1.msra.mxu0 0.0
    %329 = vmatprep.subr.mxu0 0.0
    %330 = vmatpush1.msra.mxu0 0.0
    %331 = vmatprep.subr.mxu0 0.0
    %332 = vmatpush1.msra.mxu0 0.0
    %333 = vmatprep.subr.mxu0 0.0
    %334 = vmatpush1.msra.mxu0 0.0
    %335 = vmatprep.subr.mxu0 0.0
    %336 = vmatpush1.msra.mxu0 0.0
    %337 = vmatprep.subr.mxu0 0.0
    %338 = vmatpush1.msra.mxu0 0.0
    %339 = vmatprep.subr.mxu0 0.0
    %340 = vmatpush1.msra.mxu0 0.0
    %341 = vmatprep.mubr.f32.mxu0 0.0
    %342 = vmatmul.mubr.f32.gmra.mrb[0].mxu0 %v275
    %v343 = vpop.f32.mrb[0].mxu0
    %v344 = vadd.f32 0.0, %v343
    %v345 = vpop.f32.mrb[0].mxu0
    %346 = vdwg.mxu0
    %v347 = vadd.f32 %v158, %v344
    %v348 = vxor.u32 %v347, 2147483648
    %v349 = vmul.f32 %v348, 1.442695
    %v350 = vpow.pop %v349
    %v351 = vadd.f32 %v350, 1.0
    %v352 = vrcp.pop %v351
    %v353 = vmul.f32 1.0, %v352
    %v354 = vmul.f32 %v353, %v31
    %v355 = vadd.f32 %v354, %v32
    %v356 = vmul.f32 %v355, 0.0
    %358 = vrot.lane.b32.xlu0 %v355, 64
    %v359 = vpop.permute.xlu0 %358
    %v361 = vmul.f32 %v355, %v359
    %363 = vrot.lane.b32.xlu0 %v361, 32
    %v364 = vpop.permute.xlu0 %363
    %v366 = vadd.f32 %v356, %v364
    %v367 = vtanh.pop %v366
    %369 = vrot.lane.b32.xlu0 %v367, 64
    %v370 = vpop.permute.xlu0 %369
    %v372 = vmul.f32 %v355, %v370
    %374 = vrot.lane.b32.xlu0 %v372, 32
    %v375 = vpop.permute.xlu0 %374
    %v376 = vsel %vm273, %v375, 0
    %378 = vmatprep.subr.mxu0 0.0
    %379 = vmatpush1.msra.mxu0 %v34
    %380 = vmatprep.subr.mxu0 0.0
    %381 = vmatpush1.msra.mxu0 %v35
    %382 = vmatprep.subr.mxu0 0.0
    %383 = vmatpush1.msra.mxu0 %v36
    %384 = vmatprep.subr.mxu0 0.0
    %385 = vmatpush1.msra.mxu0 %v37
    %386 = vmatprep.subr.mxu0 0.0
    %387 = vmatpush1.msra.mxu0 0.0
    %388 = vmatprep.subr.mxu0 0.0
    %389 = vmatpush1.msra.mxu0 0.0
    %390 = vmatprep.subr.mxu0 0.0
    %391 = vmatpush1.msra.mxu0 0.0
    %392 = vmatprep.subr.mxu0 0.0
    %393 = vmatpush1.msra.mxu0 0.0
    %394 = vmatprep.subr.mxu0 0.0
    %395 = vmatpush1.msra.mxu0 0.0
    %396 = vmatprep.subr.mxu0 0.0
    %397 = vmatpush1.msra.mxu0 0.0
    %398 = vmatprep.subr.mxu0 0.0
    %399 = vmatpush1.msra.mxu0 0.0
    %400 = vmatprep.subr.mxu0 0.0
    %401 = vmatpush1.msra.mxu0 0.0
    %402 = vmatprep.subr.mxu0 0.0
    %403 = vmatpush1.msra.mxu0 0.0
    %404 = vmatprep.subr.mxu0 0.0
    %405 = vmatpush1.msra.mxu0 0.0
    %406 = vmatprep.subr.mxu0 0.0
    %407 = vmatpush1.msra.mxu0 0.0
    %408 = vmatprep.subr.mxu0 0.0
    %409 = vmatpush1.msra.mxu0 0.0
    %410 = vmatprep.subr.mxu0 0.0
    %411 = vmatpush1.msra.mxu0 0.0
    %412 = vmatprep.subr.mxu0 0.0
    %413 = vmatpush1.msra.mxu0 0.0
    %414 = vmatprep.subr.mxu0 0.0
    %415 = vmatpush1.msra.mxu0 0.0
    %416 = vmatprep.subr.mxu0 0.0
    %417 = vmatpush1.msra.mxu0 0.0
    %418 = vmatprep.subr.mxu0 0.0
    %419 = vmatpush1.msra.mxu0 0.0
    %420 = vmatprep.subr.mxu0 0.0
    %421 = vmatpush1.msra.mxu0 0.0
    %422 = vmatprep.subr.mxu0 0.0
    %423 = vmatpush1.msra.mxu0 0.0
    %424 = vmatprep.subr.mxu0 0.0
    %425 = vmatpush1.msra.mxu0 0.0
    %426 = vmatprep.subr.mxu0 0.0
    %427 = vmatpush1.msra.mxu0 0.0
    %428 = vmatprep.subr.mxu0 0.0
    %429 = vmatpush1.msra.mxu0 0.0
    %430 = vmatprep.subr.mxu0 0.0
    %431 = vmatpush1.msra.mxu0 0.0
    %432 = vmatprep.subr.mxu0 0.0
    %433 = vmatpush1.msra.mxu0 0.0
    %434 = vmatprep.subr.mxu0 0.0
    %435 = vmatpush1.msra.mxu0 0.0
    %436 = vmatprep.subr.mxu0 0.0
    %437 = vmatpush1.msra.mxu0 0.0
    %438 = vmatprep.subr.mxu0 0.0
    %439 = vmatpush1.msra.mxu0 0.0
    %440 = vmatprep.subr.mxu0 0.0
    %441 = vmatpush1.msra.mxu0 0.0
    %442 = vmatprep.mubr.f32.mxu0 0.0
    %443 = vmatmul.mubr.f32.gmra.mrb[0].mxu0 %v376
    %v444 = vpop.f32.mrb[0].mxu0
    %v445 = vadd.f32 0.0, %v444
    %v446 = vpop.f32.mrb[0].mxu0
    %447 = vdwg.mxu0
    %v448 = vadd.f32 %v163, %v445
    %v449 = vxor.u32 %v448, 2147483648
    %v450 = vmul.f32 %v449, 1.442695
    %v451 = vpow.pop %v450
    %v452 = vadd.f32 %v451, 1.0
    %v453 = vrcp.pop %v452
    %v454 = vmul.f32 1.0, %v453
    %v455 = vmul.f32 %v454, %v31
    %v456 = vadd.f32 %v455, %v32
    %v457 = vmul.f32 %v456, %v366
    %459 = vrot.lane.b32.xlu0 %v456, 64
    %v460 = vpop.permute.xlu0 %459
    %v462 = vmul.f32 %v456, %v460
    %464 = vrot.lane.b32.xlu0 %v462, 32
    %v465 = vpop.permute.xlu0 %464
    %v467 = vadd.f32 %v457, %v465
    %v468 = vtanh.pop %v467
    %470 = vrot.lane.b32.xlu0 %v468, 64
    %v471 = vpop.permute.xlu0 %470
    %v473 = vmul.f32 %v456, %v471
    %475 = vrot.lane.b32.xlu0 %v473, 32
    %v476 = vpop.permute.xlu0 %475
    %v477 = vsel %vm273, %v476, 0
    %479 = vmatprep.subr.mxu0 0.0
    %480 = vmatpush1.msra.mxu0 %v34
    %481 = vmatprep.subr.mxu0 0.0
    %482 = vmatpush1.msra.mxu0 %v35
    %483 = vmatprep.subr.mxu0 0.0
    %484 = vmatpush1.msra.mxu0 %v36
    %485 = vmatprep.subr.mxu0 0.0
    %486 = vmatpush1.msra.mxu0 %v37
    %487 = vmatprep.subr.mxu0 0.0
    %488 = vmatpush1.msra.mxu0 0.0
    %489 = vmatprep.subr.mxu0 0.0
    %490 = vmatpush1.msra.mxu0 0.0
    %491 = vmatprep.subr.mxu0 0.0
    %492 = vmatpush1.msra.mxu0 0.0
    %493 = vmatprep.subr.mxu0 0.0
    %494 = vmatpush1.msra.mxu0 0.0
    %495 = vmatprep.subr.mxu0 0.0
    %496 = vmatpush1.msra.mxu0 0.0
    %497 = vmatprep.subr.mxu0 0.0
    %498 = vmatpush1.msra.mxu0 0.0
    %499 = vmatprep.subr.mxu0 0.0
    %500 = vmatpush1.msra.mxu0 0.0
    %501 = vmatprep.subr.mxu0 0.0
    %502 = vmatpush1.msra.mxu0 0.0
    %503 = vmatprep.subr.mxu0 0.0
    %504 = vmatpush1.msra.mxu0 0.0
    %505 = vmatprep.subr.mxu0 0.0
    %506 = vmatpush1.msra.mxu0 0.0
    %507 = vmatprep.subr.mxu0 0.0
    %508 = vmatpush1.msra.mxu0 0.0
    %509 = vmatprep.subr.mxu0 0.0
    %510 = vmatpush1.msra.mxu0 0.0
    %511 = vmatprep.subr.mxu0 0.0
    %512 = vmatpush1.msra.mxu0 0.0
    %513 = vmatprep.subr.mxu0 0.0
    %514 = vmatpush1.msra.mxu0 0.0
    %515 = vmatprep.subr.mxu0 0.0
    %516 = vmatpush1.msra.mxu0 0.0
    %517 = vmatprep.subr.mxu0 0.0
    %518 = vmatpush1.msra.mxu0 0.0
    %519 = vmatprep.subr.mxu0 0.0
    %520 = vmatpush1.msra.mxu0 0.0
    %521 = vmatprep.subr.mxu0 0.0
    %522 = vmatpush1.msra.mxu0 0.0
    %523 = vmatprep.subr.mxu0 0.0
    %524 = vmatpush1.msra.mxu0 0.0
    %525 = vmatprep.subr.mxu0 0.0
    %526 = vmatpush1.msra.mxu0 0.0
    %527 = vmatprep.subr.mxu0 0.0
    %528 = vmatpush1.msra.mxu0 0.0
    %529 = vmatprep.subr.mxu0 0.0
    %530 = vmatpush1.msra.mxu0 0.0
    %531 = vmatprep.subr.mxu0 0.0
    %532 = vmatpush1.msra.mxu0 0.0
    %533 = vmatprep.subr.mxu0 0.0
    %534 = vmatpush1.msra.mxu0 0.0
    %535 = vmatprep.subr.mxu0 0.0
    %536 = vmatpush1.msra.mxu0 0.0
    %537 = vmatprep.subr.mxu0 0.0
    %538 = vmatpush1.msra.mxu0 0.0
    %539 = vmatprep.subr.mxu0 0.0
    %540 = vmatpush1.msra.mxu0 0.0
    %541 = vmatprep.subr.mxu0 0.0
    %542 = vmatpush1.msra.mxu0 0.0
    %543 = vmatprep.mubr.f32.mxu0 0.0
    %544 = vmatmul.mubr.f32.gmra.mrb[0].mxu0 %v477
    %v545 = vpop.f32.mrb[0].mxu0
    %v546 = vadd.f32 0.0, %v545
    %v547 = vpop.f32.mrb[0].mxu0
    %548 = vdwg.mxu0
    %v549 = vadd.f32 %v168, %v546
    %v550 = vxor.u32 %v549, 2147483648
    %v551 = vmul.f32 %v550, 1.442695
    %v552 = vpow.pop %v551
    %v553 = vadd.f32 %v552, 1.0
    %v554 = vrcp.pop %v553
    %v555 = vmul.f32 1.0, %v554
    %v556 = vmul.f32 %v555, %v31
    %v557 = vadd.f32 %v556, %v32
    %v558 = vmul.f32 %v557, %v467
    %560 = vrot.lane.b32.xlu0 %v557, 64
    %v561 = vpop.permute.xlu0 %560
    %v563 = vmul.f32 %v557, %v561
    %565 = vrot.lane.b32.xlu0 %v563, 32
    %v566 = vpop.permute.xlu0 %565
    %v568 = vadd.f32 %v558, %v566
    %v569 = vtanh.pop %v568
    %571 = vrot.lane.b32.xlu0 %v569, 64
    %v572 = vpop.permute.xlu0 %571
    %v574 = vmul.f32 %v557, %v572
    %576 = vrot.lane.b32.xlu0 %v574, 32
    %v577 = vpop.permute.xlu0 %576
    %v578 = vsel %vm273, %v577, 0
    %580 = vmatprep.subr.mxu0 0.0
    %581 = vmatpush1.msra.mxu0 %v34
    %582 = vmatprep.subr.mxu0 0.0
    %583 = vmatpush1.msra.mxu0 %v35
    %584 = vmatprep.subr.mxu0 0.0
    %585 = vmatpush1.msra.mxu0 %v36
    %586 = vmatprep.subr.mxu0 0.0
    %587 = vmatpush1.msra.mxu0 %v37
    %588 = vmatprep.subr.mxu0 0.0
    %589 = vmatpush1.msra.mxu0 0.0
    %590 = vmatprep.subr.mxu0 0.0
    %591 = vmatpush1.msra.mxu0 0.0
    %592 = vmatprep.subr.mxu0 0.0
    %593 = vmatpush1.msra.mxu0 0.0
    %594 = vmatprep.subr.mxu0 0.0
    %595 = vmatpush1.msra.mxu0 0.0
    %596 = vmatprep.subr.mxu0 0.0
    %597 = vmatpush1.msra.mxu0 0.0
    %598 = vmatprep.subr.mxu0 0.0
    %599 = vmatpush1.msra.mxu0 0.0
    %600 = vmatprep.subr.mxu0 0.0
    %601 = vmatpush1.msra.mxu0 0.0
    %602 = vmatprep.subr.mxu0 0.0
    %603 = vmatpush1.msra.mxu0 0.0
    %604 = vmatprep.subr.mxu0 0.0
    %605 = vmatpush1.msra.mxu0 0.0
    %606 = vmatprep.subr.mxu0 0.0
    %607 = vmatpush1.msra.mxu0 0.0
    %608 = vmatprep.subr.mxu0 0.0
    %609 = vmatpush1.msra.mxu0 0.0
    %610 = vmatprep.subr.mxu0 0.0
    %611 = vmatpush1.msra.mxu0 0.0
    %612 = vmatprep.subr.mxu0 0.0
    %613 = vmatpush1.msra.mxu0 0.0
    %614 = vmatprep.subr.mxu0 0.0
    %615 = vmatpush1.msra.mxu0 0.0
    %616 = vmatprep.subr.mxu0 0.0
    %617 = vmatpush1.msra.mxu0 0.0
    %618 = vmatprep.subr.mxu0 0.0
    %619 = vmatpush1.msra.mxu0 0.0
    %620 = vmatprep.subr.mxu0 0.0
    %621 = vmatpush1.msra.mxu0 0.0
    %622 = vmatprep.subr.mxu0 0.0
    %623 = vmatpush1.msra.mxu0 0.0
    %624 = vmatprep.subr.mxu0 0.0
    %625 = vmatpush1.msra.mxu0 0.0
    %626 = vmatprep.subr.mxu0 0.0
    %627 = vmatpush1.msra.mxu0 0.0
    %628 = vmatprep.subr.mxu0 0.0
    %629 = vmatpush1.msra.mxu0 0.0
    %630 = vmatprep.subr.mxu0 0.0
    %631 = vmatpush1.msra.mxu0 0.0
    %632 = vmatprep.subr.mxu0 0.0
    %633 = vmatpush1.msra.mxu0 0.0
    %634 = vmatprep.subr.mxu0 0.0
    %635 = vmatpush1.msra.mxu0 0.0
    %636 = vmatprep.subr.mxu0 0.0
    %637 = vmatpush1.msra.mxu0 0.0
    %638 = vmatprep.subr.mxu0 0.0
    %639 = vmatpush1.msra.mxu0 0.0
    %640 = vmatprep.subr.mxu0 0.0
    %641 = vmatpush1.msra.mxu0 0.0
    %642 = vmatprep.subr.mxu0 0.0
    %643 = vmatpush1.msra.mxu0 0.0
    %644 = vmatprep.mubr.f32.mxu0 0.0
    %645 = vmatmul.mubr.f32.gmra.mrb[0].mxu0 %v578
    %v646 = vpop.f32.mrb[0].mxu0
    %v647 = vadd.f32 0.0, %v646
    %v648 = vpop.f32.mrb[0].mxu0
    %649 = vdwg.mxu0
    %v650 = vadd.f32 %v173, %v647
    %v651 = vxor.u32 %v650, 2147483648
    %v652 = vmul.f32 %v651, 1.442695
    %v653 = vpow.pop %v652
    %v654 = vadd.f32 %v653, 1.0
    %v655 = vrcp.pop %v654
    %v656 = vmul.f32 1.0, %v655
    %v657 = vmul.f32 %v656, %v31
    %v658 = vadd.f32 %v657, %v32
    %v659 = vmul.f32 %v658, %v568
    %661 = vrot.lane.b32.xlu0 %v658, 64
    %v662 = vpop.permute.xlu0 %661
    %v664 = vmul.f32 %v658, %v662
    %666 = vrot.lane.b32.xlu0 %v664, 32
    %v667 = vpop.permute.xlu0 %666
    %v669 = vadd.f32 %v659, %v667
    %v670 = vtanh.pop %v669
    %672 = vrot.lane.b32.xlu0 %v670, 64
    %v673 = vpop.permute.xlu0 %672
    %v675 = vmul.f32 %v658, %v673
    %677 = vrot.lane.b32.xlu0 %v675, 32
    %v678 = vpop.permute.xlu0 %677
    %v679 = vsel %vm273, %v678, 0
    %681 = vmatprep.subr.mxu0 0.0
    %682 = vmatpush1.msra.mxu0 %v34
    %683 = vmatprep.subr.mxu0 0.0
    %684 = vmatpush1.msra.mxu0 %v35
    %685 = vmatprep.subr.mxu0 0.0
    %686 = vmatpush1.msra.mxu0 %v36
    %687 = vmatprep.subr.mxu0 0.0
    %688 = vmatpush1.msra.mxu0 %v37
    %689 = vmatprep.subr.mxu0 0.0
    %690 = vmatpush1.msra.mxu0 0.0
    %691 = vmatprep.subr.mxu0 0.0
    %692 = vmatpush1.msra.mxu0 0.0
    %693 = vmatprep.subr.mxu0 0.0
    %694 = vmatpush1.msra.mxu0 0.0
    %695 = vmatprep.subr.mxu0 0.0
    %696 = vmatpush1.msra.mxu0 0.0
    %697 = vmatprep.subr.mxu0 0.0
    %698 = vmatpush1.msra.mxu0 0.0
    %699 = vmatprep.subr.mxu0 0.0
    %700 = vmatpush1.msra.mxu0 0.0
    %701 = vmatprep.subr.mxu0 0.0
    %702 = vmatpush1.msra.mxu0 0.0
    %703 = vmatprep.subr.mxu0 0.0
    %704 = vmatpush1.msra.mxu0 0.0
    %705 = vmatprep.subr.mxu0 0.0
    %706 = vmatpush1.msra.mxu0 0.0
    %707 = vmatprep.subr.mxu0 0.0
    %708 = vmatpush1.msra.mxu0 0.0
    %709 = vmatprep.subr.mxu0 0.0
    %710 = vmatpush1.msra.mxu0 0.0
    %711 = vmatprep.subr.mxu0 0.0
    %712 = vmatpush1.msra.mxu0 0.0
    %713 = vmatprep.subr.mxu0 0.0
    %714 = vmatpush1.msra.mxu0 0.0
    %715 = vmatprep.subr.mxu0 0.0
    %716 = vmatpush1.msra.mxu0 0.0
    %717 = vmatprep.subr.mxu0 0.0
    %718 = vmatpush1.msra.mxu0 0.0
    %719 = vmatprep.subr.mxu0 0.0
    %720 = vmatpush1.msra.mxu0 0.0
    %721 = vmatprep.subr.mxu0 0.0
    %722 = vmatpush1.msra.mxu0 0.0
    %723 = vmatprep.subr.mxu0 0.0
    %724 = vmatpush1.msra.mxu0 0.0
    %725 = vmatprep.subr.mxu0 0.0
    %726 = vmatpush1.msra.mxu0 0.0
    %727 = vmatprep.subr.mxu0 0.0
    %728 = vmatpush1.msra.mxu0 0.0
    %729 = vmatprep.subr.mxu0 0.0
    %730 = vmatpush1.msra.mxu0 0.0
    %731 = vmatprep.subr.mxu0 0.0
    %732 = vmatpush1.msra.mxu0 0.0
    %733 = vmatprep.subr.mxu0 0.0
    %734 = vmatpush1.msra.mxu0 0.0
    %735 = vmatprep.subr.mxu0 0.0
    %736 = vmatpush1.msra.mxu0 0.0
    %737 = vmatprep.subr.mxu0 0.0
    %738 = vmatpush1.msra.mxu0 0.0
    %739 = vmatprep.subr.mxu0 0.0
    %740 = vmatpush1.msra.mxu0 0.0
    %741 = vmatprep.subr.mxu0 0.0
    %742 = vmatpush1.msra.mxu0 0.0
    %743 = vmatprep.subr.mxu0 0.0
    %744 = vmatpush1.msra.mxu0 0.0
    %745 = vmatprep.mubr.f32.mxu0 0.0
    %746 = vmatmul.mubr.f32.gmra.mrb[0].mxu0 %v679
    %v747 = vpop.f32.mrb[0].mxu0
    %v748 = vadd.f32 0.0, %v747
    %v749 = vpop.f32.mrb[0].mxu0
    %750 = vdwg.mxu0
    %v751 = vadd.f32 %v178, %v748
    %v752 = vxor.u32 %v751, 2147483648
    %v753 = vmul.f32 %v752, 1.442695
    %v754 = vpow.pop %v753
    %v755 = vadd.f32 %v754, 1.0
    %v756 = vrcp.pop %v755
    %v757 = vmul.f32 1.0, %v756
    %v758 = vmul.f32 %v757, %v31
    %v759 = vadd.f32 %v758, %v32
    %v760 = vmul.f32 %v759, %v669
    %762 = vrot.lane.b32.xlu0 %v759, 64
    %v763 = vpop.permute.xlu0 %762
    %v765 = vmul.f32 %v759, %v763
    %767 = vrot.lane.b32.xlu0 %v765, 32
    %v768 = vpop.permute.xlu0 %767
    %v770 = vadd.f32 %v760, %v768
    %v771 = vtanh.pop %v770
    %773 = vrot.lane.b32.xlu0 %v771, 64
    %v774 = vpop.permute.xlu0 %773
    %v776 = vmul.f32 %v759, %v774
    %778 = vrot.lane.b32.xlu0 %v776, 32
    %v779 = vpop.permute.xlu0 %778
    %v780 = vsel %vm273, %v779, 0
    %782 = vmatprep.subr.mxu0 0.0
    %783 = vmatpush1.msra.mxu0 %v34
    %784 = vmatprep.subr.mxu0 0.0
    %785 = vmatpush1.msra.mxu0 %v35
    %786 = vmatprep.subr.mxu0 0.0
    %787 = vmatpush1.msra.mxu0 %v36
    %788 = vmatprep.subr.mxu0 0.0
    %789 = vmatpush1.msra.mxu0 %v37
    %790 = vmatprep.subr.mxu0 0.0
    %791 = vmatpush1.msra.mxu0 0.0
    %792 = vmatprep.subr.mxu0 0.0
    %793 = vmatpush1.msra.mxu0 0.0
    %794 = vmatprep.subr.mxu0 0.0
    %795 = vmatpush1.msra.mxu0 0.0
    %796 = vmatprep.subr.mxu0 0.0
    %797 = vmatpush1.msra.mxu0 0.0
    %798 = vmatprep.subr.mxu0 0.0
    %799 = vmatpush1.msra.mxu0 0.0
    %800 = vmatprep.subr.mxu0 0.0
    %801 = vmatpush1.msra.mxu0 0.0
    %802 = vmatprep.subr.mxu0 0.0
    %803 = vmatpush1.msra.mxu0 0.0
    %804 = vmatprep.subr.mxu0 0.0
    %805 = vmatpush1.msra.mxu0 0.0
    %806 = vmatprep.subr.mxu0 0.0
    %807 = vmatpush1.msra.mxu0 0.0
    %808 = vmatprep.subr.mxu0 0.0
    %809 = vmatpush1.msra.mxu0 0.0
    %810 = vmatprep.subr.mxu0 0.0
    %811 = vmatpush1.msra.mxu0 0.0
    %812 = vmatprep.subr.mxu0 0.0
    %813 = vmatpush1.msra.mxu0 0.0
    %814 = vmatprep.subr.mxu0 0.0
    %815 = vmatpush1.msra.mxu0 0.0
    %816 = vmatprep.subr.mxu0 0.0
    %817 = vmatpush1.msra.mxu0 0.0
    %818 = vmatprep.subr.mxu0 0.0
    %819 = vmatpush1.msra.mxu0 0.0
    %820 = vmatprep.subr.mxu0 0.0
    %821 = vmatpush1.msra.mxu0 0.0
    %822 = vmatprep.subr.mxu0 0.0
    %823 = vmatpush1.msra.mxu0 0.0
    %824 = vmatprep.subr.mxu0 0.0
    %825 = vmatpush1.msra.mxu0 0.0
    %826 = vmatprep.subr.mxu0 0.0
    %827 = vmatpush1.msra.mxu0 0.0
    %828 = vmatprep.subr.mxu0 0.0
    %829 = vmatpush1.msra.mxu0 0.0
    %830 = vmatprep.subr.mxu0 0.0
    %831 = vmatpush1.msra.mxu0 0.0
    %832 = vmatprep.subr.mxu0 0.0
    %833 = vmatpush1.msra.mxu0 0.0
    %834 = vmatprep.subr.mxu0 0.0
    %835 = vmatpush1.msra.mxu0 0.0
    %836 = vmatprep.subr.mxu0 0.0
    %837 = vmatpush1.msra.mxu0 0.0
    %838 = vmatprep.subr.mxu0 0.0
    %839 = vmatpush1.msra.mxu0 0.0
    %840 = vmatprep.subr.mxu0 0.0
    %841 = vmatpush1.msra.mxu0 0.0
    %842 = vmatprep.subr.mxu0 0.0
    %843 = vmatpush1.msra.mxu0 0.0
    %844 = vmatprep.subr.mxu0 0.0
    %845 = vmatpush1.msra.mxu0 0.0
    %846 = vmatprep.mubr.f32.mxu0 0.0
    %847 = vmatmul.mubr.f32.gmra.mrb[0].mxu0 %v780
    %v848 = vpop.f32.mrb[0].mxu0
    %v849 = vadd.f32 0.0, %v848
    %v850 = vpop.f32.mrb[0].mxu0
    %851 = vdwg.mxu0
    %v852 = vadd.f32 %v183, %v849
    %v853 = vxor.u32 %v852, 2147483648
    %v854 = vmul.f32 %v853, 1.442695
    %v855 = vpow.pop %v854
    %v856 = vadd.f32 %v855, 1.0
    %v857 = vrcp.pop %v856
    %v858 = vmul.f32 1.0, %v857
    %v859 = vmul.f32 %v858, %v31
    %v860 = vadd.f32 %v859, %v32
    %v861 = vmul.f32 %v860, %v770
    %863 = vrot.lane.b32.xlu0 %v860, 64
    %v864 = vpop.permute.xlu0 %863
    %v866 = vmul.f32 %v860, %v864
    %868 = vrot.lane.b32.xlu0 %v866, 32
    %v869 = vpop.permute.xlu0 %868
    %v871 = vadd.f32 %v861, %v869
    %v872 = vtanh.pop %v871
    %874 = vrot.lane.b32.xlu0 %v872, 64
    %v875 = vpop.permute.xlu0 %874
    %v877 = vmul.f32 %v860, %v875
    %879 = vrot.lane.b32.xlu0 %v877, 32
    %v880 = vpop.permute.xlu0 %879
    %v881 = vsel %vm273, %v880, 0
    %883 = vmatprep.subr.mxu0 0.0
    %884 = vmatpush1.msra.mxu0 %v34
    %885 = vmatprep.subr.mxu0 0.0
    %886 = vmatpush1.msra.mxu0 %v35
    %887 = vmatprep.subr.mxu0 0.0
    %888 = vmatpush1.msra.mxu0 %v36
    %889 = vmatprep.subr.mxu0 0.0
    %890 = vmatpush1.msra.mxu0 %v37
    %891 = vmatprep.subr.mxu0 0.0
    %892 = vmatpush1.msra.mxu0 0.0
    %893 = vmatprep.subr.mxu0 0.0
    %894 = vmatpush1.msra.mxu0 0.0
    %895 = vmatprep.subr.mxu0 0.0
    %896 = vmatpush1.msra.mxu0 0.0
    %897 = vmatprep.subr.mxu0 0.0
    %898 = vmatpush1.msra.mxu0 0.0
    %899 = vmatprep.subr.mxu0 0.0
    %900 = vmatpush1.msra.mxu0 0.0
    %901 = vmatprep.subr.mxu0 0.0
    %902 = vmatpush1.msra.mxu0 0.0
    %903 = vmatprep.subr.mxu0 0.0
    %904 = vmatpush1.msra.mxu0 0.0
    %905 = vmatprep.subr.mxu0 0.0
    %906 = vmatpush1.msra.mxu0 0.0
    %907 = vmatprep.subr.mxu0 0.0
    %908 = vmatpush1.msra.mxu0 0.0
    %909 = vmatprep.subr.mxu0 0.0
    %910 = vmatpush1.msra.mxu0 0.0
    %911 = vmatprep.subr.mxu0 0.0
    %912 = vmatpush1.msra.mxu0 0.0
    %913 = vmatprep.subr.mxu0 0.0
    %914 = vmatpush1.msra.mxu0 0.0
    %915 = vmatprep.subr.mxu0 0.0
    %916 = vmatpush1.msra.mxu0 0.0
    %917 = vmatprep.subr.mxu0 0.0
    %918 = vmatpush1.msra.mxu0 0.0
    %919 = vmatprep.subr.mxu0 0.0
    %920 = vmatpush1.msra.mxu0 0.0
    %921 = vmatprep.subr.mxu0 0.0
    %922 = vmatpush1.msra.mxu0 0.0
    %923 = vmatprep.subr.mxu0 0.0
    %924 = vmatpush1.msra.mxu0 0.0
    %925 = vmatprep.subr.mxu0 0.0
    %926 = vmatpush1.msra.mxu0 0.0
    %927 = vmatprep.subr.mxu0 0.0
    %928 = vmatpush1.msra.mxu0 0.0
    %929 = vmatprep.subr.mxu0 0.0
    %930 = vmatpush1.msra.mxu0 0.0
    %931 = vmatprep.subr.mxu0 0.0
    %932 = vmatpush1.msra.mxu0 0.0
    %933 = vmatprep.subr.mxu0 0.0
    %934 = vmatpush1.msra.mxu0 0.0
    %935 = vmatprep.subr.mxu0 0.0
    %936 = vmatpush1.msra.mxu0 0.0
    %937 = vmatprep.subr.mxu0 0.0
    %938 = vmatpush1.msra.mxu0 0.0
    %939 = vmatprep.subr.mxu0 0.0
    %940 = vmatpush1.msra.mxu0 0.0
    %941 = vmatprep.subr.mxu0 0.0
    %942 = vmatpush1.msra.mxu0 0.0
    %943 = vmatprep.subr.mxu0 0.0
    %944 = vmatpush1.msra.mxu0 0.0
    %945 = vmatprep.subr.mxu0 0.0
    %946 = vmatpush1.msra.mxu0 0.0
    %947 = vmatprep.mubr.f32.mxu0 0.0
    %948 = vmatmul.mubr.f32.gmra.mrb[0].mxu0 %v881
    %v949 = vpop.f32.mrb[0].mxu0
    %v950 = vadd.f32 0.0, %v949
    %v951 = vpop.f32.mrb[0].mxu0
    %952 = vdwg.mxu0
    %v953 = vadd.f32 %v188, %v950
    %v954 = vxor.u32 %v953, 2147483648
    %v955 = vmul.f32 %v954, 1.442695
    %v956 = vpow.pop %v955
    %v957 = vadd.f32 %v956, 1.0
    %v958 = vrcp.pop %v957
    %v959 = vmul.f32 1.0, %v958
    %v960 = vmul.f32 %v959, %v31
    %v961 = vadd.f32 %v960, %v32
    %v962 = vmul.f32 %v961, %v871
    %964 = vrot.lane.b32.xlu0 %v961, 64
    %v965 = vpop.permute.xlu0 %964
    %v967 = vmul.f32 %v961, %v965
    %969 = vrot.lane.b32.xlu0 %v967, 32
    %v970 = vpop.permute.xlu0 %969
    %v972 = vadd.f32 %v962, %v970
    %v973 = vtanh.pop %v972
    %975 = vrot.lane.b32.xlu0 %v973, 64
    %v976 = vpop.permute.xlu0 %975
    %v978 = vmul.f32 %v961, %v976
    %980 = vrot.lane.b32.xlu0 %v978, 32
    %v981 = vpop.permute.xlu0 %980
    %v982 = vsel %vm273, %v981, 0
    %984 = vmatprep.subr.mxu0 0.0
    %985 = vmatpush1.msra.mxu0 %v34
    %986 = vmatprep.subr.mxu0 0.0
    %987 = vmatpush1.msra.mxu0 %v35
    %988 = vmatprep.subr.mxu0 0.0
    %989 = vmatpush1.msra.mxu0 %v36
    %990 = vmatprep.subr.mxu0 0.0
    %991 = vmatpush1.msra.mxu0 %v37
    %992 = vmatprep.subr.mxu0 0.0
    %993 = vmatpush1.msra.mxu0 0.0
    %994 = vmatprep.subr.mxu0 0.0
    %995 = vmatpush1.msra.mxu0 0.0
    %996 = vmatprep.subr.mxu0 0.0
    %997 = vmatpush1.msra.mxu0 0.0
    %998 = vmatprep.subr.mxu0 0.0
    %999 = vmatpush1.msra.mxu0 0.0
    %1000 = vmatprep.subr.mxu0 0.0
    %1001 = vmatpush1.msra.mxu0 0.0
    %1002 = vmatprep.subr.mxu0 0.0
    %1003 = vmatpush1.msra.mxu0 0.0
    %1004 = vmatprep.subr.mxu0 0.0
    %1005 = vmatpush1.msra.mxu0 0.0
    %1006 = vmatprep.subr.mxu0 0.0
    %1007 = vmatpush1.msra.mxu0 0.0
    %1008 = vmatprep.subr.mxu0 0.0
    %1009 = vmatpush1.msra.mxu0 0.0
    %1010 = vmatprep.subr.mxu0 0.0
    %1011 = vmatpush1.msra.mxu0 0.0
    %1012 = vmatprep.subr.mxu0 0.0
    %1013 = vmatpush1.msra.mxu0 0.0
    %1014 = vmatprep.subr.mxu0 0.0
    %1015 = vmatpush1.msra.mxu0 0.0
    %1016 = vmatprep.subr.mxu0 0.0
    %1017 = vmatpush1.msra.mxu0 0.0
    %1018 = vmatprep.subr.mxu0 0.0
    %1019 = vmatpush1.msra.mxu0 0.0
    %1020 = vmatprep.subr.mxu0 0.0
    %1021 = vmatpush1.msra.mxu0 0.0
    %1022 = vmatprep.subr.mxu0 0.0
    %1023 = vmatpush1.msra.mxu0 0.0
    %1024 = vmatprep.subr.mxu0 0.0
    %1025 = vmatpush1.msra.mxu0 0.0
    %1026 = vmatprep.subr.mxu0 0.0
    %1027 = vmatpush1.msra.mxu0 0.0
    %1028 = vmatprep.subr.mxu0 0.0
    %1029 = vmatpush1.msra.mxu0 0.0
    %1030 = vmatprep.subr.mxu0 0.0
    %1031 = vmatpush1.msra.mxu0 0.0
    %1032 = vmatprep.subr.mxu0 0.0
    %1033 = vmatpush1.msra.mxu0 0.0
    %1034 = vmatprep.subr.mxu0 0.0
    %1035 = vmatpush1.msra.mxu0 0.0
    %1036 = vmatprep.subr.mxu0 0.0
    %1037 = vmatpush1.msra.mxu0 0.0
    %1038 = vmatprep.subr.mxu0 0.0
    %1039 = vmatpush1.msra.mxu0 0.0
    %1040 = vmatprep.subr.mxu0 0.0
    %1041 = vmatpush1.msra.mxu0 0.0
    %1042 = vmatprep.subr.mxu0 0.0
    %1043 = vmatpush1.msra.mxu0 0.0
    %1044 = vmatprep.subr.mxu0 0.0
    %1045 = vmatpush1.msra.mxu0 0.0
    %1046 = vmatprep.subr.mxu0 0.0
    %1047 = vmatpush1.msra.mxu0 0.0
    %1048 = vmatprep.mubr.f32.mxu0 0.0
    %1049 = vmatmul.mubr.f32.gmra.mrb[0].mxu0 %v982
    %v1050 = vpop.f32.mrb[0].mxu0
    %v1051 = vadd.f32 0.0, %v1050
    %v1052 = vpop.f32.mrb[0].mxu0
    %1053 = vdwg.mxu0
    %v1054 = vadd.f32 %v193, %v1051
    %v1055 = vxor.u32 %v1054, 2147483648
    %v1056 = vmul.f32 %v1055, 1.442695
    %v1057 = vpow.pop %v1056
    %v1058 = vadd.f32 %v1057, 1.0
    %v1059 = vrcp.pop %v1058
    %v1060 = vmul.f32 1.0, %v1059
    %v1061 = vmul.f32 %v1060, %v31
    %v1062 = vadd.f32 %v1061, %v32
    %v1063 = vmul.f32 %v1062, %v972
    %1065 = vrot.lane.b32.xlu0 %v1062, 64
    %v1066 = vpop.permute.xlu0 %1065
    %v1068 = vmul.f32 %v1062, %v1066
    %1070 = vrot.lane.b32.xlu0 %v1068, 32
    %v1071 = vpop.permute.xlu0 %1070
    %v1073 = vadd.f32 %v1063, %v1071
    %v1074 = vtanh.pop %v1073
    %1076 = vrot.lane.b32.xlu0 %v1074, 64
    %v1077 = vpop.permute.xlu0 %1076
    %v1079 = vmul.f32 %v1062, %v1077
    %1081 = vrot.lane.b32.xlu0 %v1079, 32
    %v1082 = vpop.permute.xlu0 %1081
    %v1083 = vsel %vm273, %v1082, 0
    %1085 = vmatprep.subr.mxu0 0.0
    %1086 = vmatpush1.msra.mxu0 %v41
    %1087 = vmatprep.subr.mxu0 0.0
    %1088 = vmatpush1.msra.mxu0 %v42
    %1089 = vmatprep.subr.mxu0 0.0
    %1090 = vmatpush1.msra.mxu0 %v43
    %1091 = vmatprep.subr.mxu0 0.0
    %1092 = vmatpush1.msra.mxu0 %v44
    %1093 = vmatprep.subr.mxu0 0.0
    %1094 = vmatpush1.msra.mxu0 0.0
    %1095 = vmatprep.subr.mxu0 0.0
    %1096 = vmatpush1.msra.mxu0 0.0
    %1097 = vmatprep.subr.mxu0 0.0
    %1098 = vmatpush1.msra.mxu0 0.0
    %1099 = vmatprep.subr.mxu0 0.0
    %1100 = vmatpush1.msra.mxu0 0.0
    %1101 = vmatprep.subr.mxu0 0.0
    %1102 = vmatpush1.msra.mxu0 0.0
    %1103 = vmatprep.subr.mxu0 0.0
    %1104 = vmatpush1.msra.mxu0 0.0
    %1105 = vmatprep.subr.mxu0 0.0
    %1106 = vmatpush1.msra.mxu0 0.0
    %1107 = vmatprep.subr.mxu0 0.0
    %1108 = vmatpush1.msra.mxu0 0.0
    %1109 = vmatprep.subr.mxu0 0.0
    %1110 = vmatpush1.msra.mxu0 0.0
    %1111 = vmatprep.subr.mxu0 0.0
    %1112 = vmatpush1.msra.mxu0 0.0
    %1113 = vmatprep.subr.mxu0 0.0
    %1114 = vmatpush1.msra.mxu0 0.0
    %1115 = vmatprep.subr.mxu0 0.0
    %1116 = vmatpush1.msra.mxu0 0.0
    %1117 = vmatprep.subr.mxu0 0.0
    %1118 = vmatpush1.msra.mxu0 0.0
    %1119 = vmatprep.subr.mxu0 0.0
    %1120 = vmatpush1.msra.mxu0 0.0
    %1121 = vmatprep.subr.mxu0 0.0
    %1122 = vmatpush1.msra.mxu0 0.0
    %1123 = vmatprep.subr.mxu0 0.0
    %1124 = vmatpush1.msra.mxu0 0.0
    %1125 = vmatprep.subr.mxu0 0.0
    %1126 = vmatpush1.msra.mxu0 0.0
    %1127 = vmatprep.subr.mxu0 0.0
    %1128 = vmatpush1.msra.mxu0 0.0
    %1129 = vmatprep.subr.mxu0 0.0
    %1130 = vmatpush1.msra.mxu0 0.0
    %1131 = vmatprep.subr.mxu0 0.0
    %1132 = vmatpush1.msra.mxu0 0.0
    %1133 = vmatprep.subr.mxu0 0.0
    %1134 = vmatpush1.msra.mxu0 0.0
    %1135 = vmatprep.subr.mxu0 0.0
    %1136 = vmatpush1.msra.mxu0 0.0
    %1137 = vmatprep.subr.mxu0 0.0
    %1138 = vmatpush1.msra.mxu0 0.0
    %1139 = vmatprep.subr.mxu0 0.0
    %1140 = vmatpush1.msra.mxu0 0.0
    %1141 = vmatprep.subr.mxu0 0.0
    %1142 = vmatpush1.msra.mxu0 0.0
    %1143 = vmatprep.subr.mxu0 0.0
    %1144 = vmatpush1.msra.mxu0 0.0
    %1145 = vmatprep.subr.mxu0 0.0
    %1146 = vmatpush1.msra.mxu0 0.0
    %1147 = vmatprep.subr.mxu0 0.0
    %1148 = vmatpush1.msra.mxu0 0.0
    %1149 = vmatprep.mubr.f32.mxu0 0.0
    %1150 = vmatmul.mubr.f32.gmra.mrb[0].mxu0 %v1083
    %v1151 = vpop.f32.mrb[0].mxu0
    %v1152 = vadd.f32 0.0, %v1151
    %v1153 = vpop.f32.mrb[0].mxu0
    %1154 = vdwg.mxu0
    %v1155 = vadd.f32 %v270, %v1152
    %v1156 = vxor.u32 %v1155, 2147483648
    %v1157 = vmul.f32 %v1156, 1.442695
    %v1158 = vpow.pop %v1157
    %v1159 = vadd.f32 %v1158, 1.0
    %v1160 = vrcp.pop %v1159
    %v1161 = vmul.f32 1.0, %v1160
    %v1162 = vmul.f32 %v1161, %v31
    %v1163 = vadd.f32 %v1162, %v32
    %v1164 = vmul.f32 %v1163, %v1073
    %1166 = vrot.lane.b32.xlu0 %v1163, 64
    %v1167 = vpop.permute.xlu0 %1166
    %v1169 = vmul.f32 %v1163, %v1167
    %1171 = vrot.lane.b32.xlu0 %v1169, 32
    %v1172 = vpop.permute.xlu0 %1171
    %v1174 = vadd.f32 %v1164, %v1172
    %v1175 = vtanh.pop %v1174
    %1177 = vrot.lane.b32.xlu0 %v1175, 64
    %v1178 = vpop.permute.xlu0 %1177
    %v1180 = vmul.f32 %v1163, %v1178
    %v1181 = vlaneseq
    %v1182 = vshrl.u32 %v1181, 7
    %v1183 = vsub.s32 0, %v1182
    %v1184 = vrot.slane %v49, %v1183
    %1186 = vrot.lane.b32.xlu0 %v1180, 32
    %v1187 = vpop.permute.xlu0 %1186
    %v1188 = vsel %vm273, %v1187, 0
    %1190 = vmatprep.subr.mxu0 0.0
    %1191 = vmatpush1.msra.mxu0 %v45
    %1192 = vmatprep.subr.mxu0 0.0
    %1193 = vmatpush1.msra.mxu0 %v46
    %1194 = vmatprep.subr.mxu0 0.0
    %1195 = vmatpush1.msra.mxu0 %v47
    %1196 = vmatprep.subr.mxu0 0.0
    %1197 = vmatpush1.msra.mxu0 %v48
    %1198 = vmatprep.subr.mxu0 0.0
    %1199 = vmatpush1.msra.mxu0 0.0
    %1200 = vmatprep.subr.mxu0 0.0
    %1201 = vmatpush1.msra.mxu0 0.0
    %1202 = vmatprep.subr.mxu0 0.0
    %1203 = vmatpush1.msra.mxu0 0.0
    %1204 = vmatprep.subr.mxu0 0.0
    %1205 = vmatpush1.msra.mxu0 0.0
    %1206 = vmatprep.subr.mxu0 0.0
    %1207 = vmatpush1.msra.mxu0 0.0
    %1208 = vmatprep.subr.mxu0 0.0
    %1209 = vmatpush1.msra.mxu0 0.0
    %1210 = vmatprep.subr.mxu0 0.0
    %1211 = vmatpush1.msra.mxu0 0.0
    %1212 = vmatprep.subr.mxu0 0.0
    %1213 = vmatpush1.msra.mxu0 0.0
    %1214 = vmatprep.subr.mxu0 0.0
    %1215 = vmatpush1.msra.mxu0 0.0
    %1216 = vmatprep.subr.mxu0 0.0
    %1217 = vmatpush1.msra.mxu0 0.0
    %1218 = vmatprep.subr.mxu0 0.0
    %1219 = vmatpush1.msra.mxu0 0.0
    %1220 = vmatprep.subr.mxu0 0.0
    %1221 = vmatpush1.msra.mxu0 0.0
    %1222 = vmatprep.subr.mxu0 0.0
    %1223 = vmatpush1.msra.mxu0 0.0
    %1224 = vmatprep.subr.mxu0 0.0
    %1225 = vmatpush1.msra.mxu0 0.0
    %1226 = vmatprep.subr.mxu0 0.0
    %1227 = vmatpush1.msra.mxu0 0.0
    %1228 = vmatprep.subr.mxu0 0.0
    %1229 = vmatpush1.msra.mxu0 0.0
    %1230 = vmatprep.subr.mxu0 0.0
    %1231 = vmatpush1.msra.mxu0 0.0
    %1232 = vmatprep.subr.mxu0 0.0
    %1233 = vmatpush1.msra.mxu0 0.0
    %1234 = vmatprep.subr.mxu0 0.0
    %1235 = vmatpush1.msra.mxu0 0.0
    %1236 = vmatprep.subr.mxu0 0.0
    %1237 = vmatpush1.msra.mxu0 0.0
    %1238 = vmatprep.subr.mxu0 0.0
    %1239 = vmatpush1.msra.mxu0 0.0
    %1240 = vmatprep.subr.mxu0 0.0
    %1241 = vmatpush1.msra.mxu0 0.0
    %1242 = vmatprep.subr.mxu0 0.0
    %1243 = vmatpush1.msra.mxu0 0.0
    %1244 = vmatprep.subr.mxu0 0.0
    %1245 = vmatpush1.msra.mxu0 0.0
    %1246 = vmatprep.subr.mxu0 0.0
    %1247 = vmatpush1.msra.mxu0 0.0
    %1248 = vmatprep.subr.mxu0 0.0
    %1249 = vmatpush1.msra.mxu0 0.0
    %1250 = vmatprep.subr.mxu0 0.0
    %1251 = vmatpush1.msra.mxu0 0.0
    %1252 = vmatprep.subr.mxu0 0.0
    %1253 = vmatpush1.msra.mxu0 0.0
    %1254 = vmatprep.mubr.f32.mxu0 0.0
    %1255 = vmatmul.mubr.f32.gmra.mrb[0].mxu0 %v1188
    %v1256 = vpop.f32.mrb[0].mxu0
    %v1257 = vadd.f32 %v1184, %v1256
    %v1258 = vpop.f32.mrb[0].mxu0
    %1259 = vdwg.mxu0
    %v1260 = vxor.u32 %v1257, 2147483648
    %v1261 = vmul.f32 %v1260, 1.442695
    %v1262 = vpow.pop %v1261
    %v1263 = vadd.f32 %v1262, 1.0
    %v1264 = vrcp.pop %v1263
    %v1265 = vmul.f32 1.0, %v1264
    %v1266 = vmul.f32 %v1265, %v31
    %v1267 = vadd.f32 %v1266, %v32
    %v1268 = vmul.f32 %v1267, %v1174
    %1270 = vrot.lane.b32.xlu0 %v1267, 64
    %v1271 = vpop.permute.xlu0 %1270
    %v1273 = vmul.f32 %v1267, %v1271
    %1275 = vrot.lane.b32.xlu0 %v1273, 32
    %v1276 = vpop.permute.xlu0 %1275
    %v1278 = vadd.f32 %v1268, %v1276
    %v1279 = vtanh.pop %v1278
    %1281 = vrot.lane.b32.xlu0 %v1279, 64
    %v1282 = vpop.permute.xlu0 %1281
    %v1284 = vmul.f32 %v1267, %v1282
    %1286 = vrot.lane.b32.xlu0 %v1284, 32
    %v1287 = vpop.permute.xlu0 %1286
    %v1288 = vsel %vm273, %v1287, 0
    %1290 = vmatprep.subr.mxu0 0.0
    %1291 = vmatpush1.msra.mxu0 %v45
    %1292 = vmatprep.subr.mxu0 0.0
    %1293 = vmatpush1.msra.mxu0 %v46
    %1294 = vmatprep.subr.mxu0 0.0
    %1295 = vmatpush1.msra.mxu0 %v47
    %1296 = vmatprep.subr.mxu0 0.0
    %1297 = vmatpush1.msra.mxu0 %v48
    %1298 = vmatprep.subr.mxu0 0.0
    %1299 = vmatpush1.msra.mxu0 0.0
    %1300 = vmatprep.subr.mxu0 0.0
    %1301 = vmatpush1.msra.mxu0 0.0
    %1302 = vmatprep.subr.mxu0 0.0
    %1303 = vmatpush1.msra.mxu0 0.0
    %1304 = vmatprep.subr.mxu0 0.0
    %1305 = vmatpush1.msra.mxu0 0.0
    %1306 = vmatprep.subr.mxu0 0.0
    %1307 = vmatpush1.msra.mxu0 0.0
    %1308 = vmatprep.subr.mxu0 0.0
    %1309 = vmatpush1.msra.mxu0 0.0
    %1310 = vmatprep.subr.mxu0 0.0
    %1311 = vmatpush1.msra.mxu0 0.0
    %1312 = vmatprep.subr.mxu0 0.0
    %1313 = vmatpush1.msra.mxu0 0.0
    %1314 = vmatprep.subr.mxu0 0.0
    %1315 = vmatpush1.msra.mxu0 0.0
    %1316 = vmatprep.subr.mxu0 0.0
    %1317 = vmatpush1.msra.mxu0 0.0
    %1318 = vmatprep.subr.mxu0 0.0
    %1319 = vmatpush1.msra.mxu0 0.0
    %1320 = vmatprep.subr.mxu0 0.0
    %1321 = vmatpush1.msra.mxu0 0.0
    %1322 = vmatprep.subr.mxu0 0.0
    %1323 = vmatpush1.msra.mxu0 0.0
    %1324 = vmatprep.subr.mxu0 0.0
    %1325 = vmatpush1.msra.mxu0 0.0
    %1326 = vmatprep.subr.mxu0 0.0
    %1327 = vmatpush1.msra.mxu0 0.0
    %1328 = vmatprep.subr.mxu0 0.0
    %1329 = vmatpush1.msra.mxu0 0.0
    %1330 = vmatprep.subr.mxu0 0.0
    %1331 = vmatpush1.msra.mxu0 0.0
    %1332 = vmatprep.subr.mxu0 0.0
    %1333 = vmatpush1.msra.mxu0 0.0
    %1334 = vmatprep.subr.mxu0 0.0
    %1335 = vmatpush1.msra.mxu0 0.0
    %1336 = vmatprep.subr.mxu0 0.0
    %1337 = vmatpush1.msra.mxu0 0.0
    %1338 = vmatprep.subr.mxu0 0.0
    %1339 = vmatpush1.msra.mxu0 0.0
    %1340 = vmatprep.subr.mxu0 0.0
    %1341 = vmatpush1.msra.mxu0 0.0
    %1342 = vmatprep.subr.mxu0 0.0
    %1343 = vmatpush1.msra.mxu0 0.0
    %1344 = vmatprep.subr.mxu0 0.0
    %1345 = vmatpush1.msra.mxu0 0.0
    %1346 = vmatprep.subr.mxu0 0.0
    %1347 = vmatpush1.msra.mxu0 0.0
    %1348 = vmatprep.subr.mxu0 0.0
    %1349 = vmatpush1.msra.mxu0 0.0
    %1350 = vmatprep.subr.mxu0 0.0
    %1351 = vmatpush1.msra.mxu0 0.0
    %1352 = vmatprep.subr.mxu0 0.0
    %1353 = vmatpush1.msra.mxu0 0.0
    %1354 = vmatprep.mubr.f32.mxu0 0.0
    %1355 = vmatmul.mubr.f32.gmra.mrb[0].mxu0 %v1288
    %v1356 = vpop.f32.mrb[0].mxu0
    %v1357 = vadd.f32 %v1184, %v1356
    %v1358 = vpop.f32.mrb[0].mxu0
    %1359 = vdwg.mxu0
    %v1360 = vxor.u32 %v1357, 2147483648
    %v1361 = vmul.f32 %v1360, 1.442695
    %v1362 = vpow.pop %v1361
    %v1363 = vadd.f32 %v1362, 1.0
    %v1364 = vrcp.pop %v1363
    %v1365 = vmul.f32 1.0, %v1364
    %v1366 = vmul.f32 %v1365, %v31
    %v1367 = vadd.f32 %v1366, %v32
    %v1368 = vmul.f32 %v1367, %v1278
    %1370 = vrot.lane.b32.xlu0 %v1367, 64
    %v1371 = vpop.permute.xlu0 %1370
    %v1373 = vmul.f32 %v1367, %v1371
    %1375 = vrot.lane.b32.xlu0 %v1373, 32
    %v1376 = vpop.permute.xlu0 %1375
    %v1378 = vadd.f32 %v1368, %v1376
    %v1379 = vtanh.pop %v1378
    %1381 = vrot.lane.b32.xlu0 %v1379, 64
    %v1382 = vpop.permute.xlu0 %1381
    %v1384 = vmul.f32 %v1367, %v1382
    %1386 = vrot.lane.b32.xlu0 %v1384, 32
    %v1387 = vpop.permute.xlu0 %1386
    %v1388 = vsel %vm273, %v1387, 0
    %1390 = vmatprep.subr.mxu0 0.0
    %1391 = vmatpush1.msra.mxu0 %v45
    %1392 = vmatprep.subr.mxu0 0.0
    %1393 = vmatpush1.msra.mxu0 %v46
    %1394 = vmatprep.subr.mxu0 0.0
    %1395 = vmatpush1.msra.mxu0 %v47
    %1396 = vmatprep.subr.mxu0 0.0
    %1397 = vmatpush1.msra.mxu0 %v48
    %1398 = vmatprep.subr.mxu0 0.0
    %1399 = vmatpush1.msra.mxu0 0.0
    %1400 = vmatprep.subr.mxu0 0.0
    %1401 = vmatpush1.msra.mxu0 0.0
    %1402 = vmatprep.subr.mxu0 0.0
    %1403 = vmatpush1.msra.mxu0 0.0
    %1404 = vmatprep.subr.mxu0 0.0
    %1405 = vmatpush1.msra.mxu0 0.0
    %1406 = vmatprep.subr.mxu0 0.0
    %1407 = vmatpush1.msra.mxu0 0.0
    %1408 = vmatprep.subr.mxu0 0.0
    %1409 = vmatpush1.msra.mxu0 0.0
    %1410 = vmatprep.subr.mxu0 0.0
    %1411 = vmatpush1.msra.mxu0 0.0
    %1412 = vmatprep.subr.mxu0 0.0
    %1413 = vmatpush1.msra.mxu0 0.0
    %1414 = vmatprep.subr.mxu0 0.0
    %1415 = vmatpush1.msra.mxu0 0.0
    %1416 = vmatprep.subr.mxu0 0.0
    %1417 = vmatpush1.msra.mxu0 0.0
    %1418 = vmatprep.subr.mxu0 0.0
    %1419 = vmatpush1.msra.mxu0 0.0
    %1420 = vmatprep.subr.mxu0 0.0
    %1421 = vmatpush1.msra.mxu0 0.0
    %1422 = vmatprep.subr.mxu0 0.0
    %1423 = vmatpush1.msra.mxu0 0.0
    %1424 = vmatprep.subr.mxu0 0.0
    %1425 = vmatpush1.msra.mxu0 0.0
    %1426 = vmatprep.subr.mxu0 0.0
    %1427 = vmatpush1.msra.mxu0 0.0
    %1428 = vmatprep.subr.mxu0 0.0
    %1429 = vmatpush1.msra.mxu0 0.0
    %1430 = vmatprep.subr.mxu0 0.0
    %1431 = vmatpush1.msra.mxu0 0.0
    %1432 = vmatprep.subr.mxu0 0.0
    %1433 = vmatpush1.msra.mxu0 0.0
    %1434 = vmatprep.subr.mxu0 0.0
    %1435 = vmatpush1.msra.mxu0 0.0
    %1436 = vmatprep.subr.mxu0 0.0
    %1437 = vmatpush1.msra.mxu0 0.0
    %1438 = vmatprep.subr.mxu0 0.0
    %1439 = vmatpush1.msra.mxu0 0.0
    %1440 = vmatprep.subr.mxu0 0.0
    %1441 = vmatpush1.msra.mxu0 0.0
    %1442 = vmatprep.subr.mxu0 0.0
    %1443 = vmatpush1.msra.mxu0 0.0
    %1444 = vmatprep.subr.mxu0 0.0
    %1445 = vmatpush1.msra.mxu0 0.0
    %1446 = vmatprep.subr.mxu0 0.0
    %1447 = vmatpush1.msra.mxu0 0.0
    %1448 = vmatprep.subr.mxu0 0.0
    %1449 = vmatpush1.msra.mxu0 0.0
    %1450 = vmatprep.subr.mxu0 0.0
    %1451 = vmatpush1.msra.mxu0 0.0
    %1452 = vmatprep.subr.mxu0 0.0
    %1453 = vmatpush1.msra.mxu0 0.0
    %1454 = vmatprep.mubr.f32.mxu0 0.0
    %1455 = vmatmul.mubr.f32.gmra.mrb[0].mxu0 %v1388
    %v1456 = vpop.f32.mrb[0].mxu0
    %v1457 = vadd.f32 %v1184, %v1456
    %v1458 = vpop.f32.mrb[0].mxu0
    %1459 = vdwg.mxu0
    %v1460 = vxor.u32 %v1457, 2147483648
    %v1461 = vmul.f32 %v1460, 1.442695
    %v1462 = vpow.pop %v1461
    %v1463 = vadd.f32 %v1462, 1.0
    %v1464 = vrcp.pop %v1463
    %v1465 = vmul.f32 1.0, %v1464
    %v1466 = vmul.f32 %v1465, %v31
    %v1467 = vadd.f32 %v1466, %v32
    %v1468 = vmul.f32 %v1467, %v1378
    %1470 = vrot.lane.b32.xlu0 %v1467, 64
    %v1471 = vpop.permute.xlu0 %1470
    %v1473 = vmul.f32 %v1467, %v1471
    %1475 = vrot.lane.b32.xlu0 %v1473, 32
    %v1476 = vpop.permute.xlu0 %1475
    %v1478 = vadd.f32 %v1468, %v1476
    %v1479 = vtanh.pop %v1478
    %1481 = vrot.lane.b32.xlu0 %v1479, 64
    %v1482 = vpop.permute.xlu0 %1481
    %v1484 = vmul.f32 %v1467, %v1482
    %1486 = vrot.lane.b32.xlu0 %v1484, 32
    %v1487 = vpop.permute.xlu0 %1486
    %v1488 = vsel %vm273, %v1487, 0
    %1490 = vmatprep.subr.mxu0 0.0
    %1491 = vmatpush1.msra.mxu0 %v45
    %1492 = vmatprep.subr.mxu0 0.0
    %1493 = vmatpush1.msra.mxu0 %v46
    %1494 = vmatprep.subr.mxu0 0.0
    %1495 = vmatpush1.msra.mxu0 %v47
    %1496 = vmatprep.subr.mxu0 0.0
    %1497 = vmatpush1.msra.mxu0 %v48
    %1498 = vmatprep.subr.mxu0 0.0
    %1499 = vmatpush1.msra.mxu0 0.0
    %1500 = vmatprep.subr.mxu0 0.0
    %1501 = vmatpush1.msra.mxu0 0.0
    %1502 = vmatprep.subr.mxu0 0.0
    %1503 = vmatpush1.msra.mxu0 0.0
    %1504 = vmatprep.subr.mxu0 0.0
    %1505 = vmatpush1.msra.mxu0 0.0
    %1506 = vmatprep.subr.mxu0 0.0
    %1507 = vmatpush1.msra.mxu0 0.0
    %1508 = vmatprep.subr.mxu0 0.0
    %1509 = vmatpush1.msra.mxu0 0.0
    %1510 = vmatprep.subr.mxu0 0.0
    %1511 = vmatpush1.msra.mxu0 0.0
    %1512 = vmatprep.subr.mxu0 0.0
    %1513 = vmatpush1.msra.mxu0 0.0
    %1514 = vmatprep.subr.mxu0 0.0
    %1515 = vmatpush1.msra.mxu0 0.0
    %1516 = vmatprep.subr.mxu0 0.0
    %1517 = vmatpush1.msra.mxu0 0.0
    %1518 = vmatprep.subr.mxu0 0.0
    %1519 = vmatpush1.msra.mxu0 0.0
    %1520 = vmatprep.subr.mxu0 0.0
    %1521 = vmatpush1.msra.mxu0 0.0
    %1522 = vmatprep.subr.mxu0 0.0
    %1523 = vmatpush1.msra.mxu0 0.0
    %1524 = vmatprep.subr.mxu0 0.0
    %1525 = vmatpush1.msra.mxu0 0.0
    %1526 = vmatprep.subr.mxu0 0.0
    %1527 = vmatpush1.msra.mxu0 0.0
    %1528 = vmatprep.subr.mxu0 0.0
    %1529 = vmatpush1.msra.mxu0 0.0
    %1530 = vmatprep.subr.mxu0 0.0
    %1531 = vmatpush1.msra.mxu0 0.0
    %1532 = vmatprep.subr.mxu0 0.0
    %1533 = vmatpush1.msra.mxu0 0.0
    %1534 = vmatprep.subr.mxu0 0.0
    %1535 = vmatpush1.msra.mxu0 0.0
    %1536 = vmatprep.subr.mxu0 0.0
    %1537 = vmatpush1.msra.mxu0 0.0
    %1538 = vmatprep.subr.mxu0 0.0
    %1539 = vmatpush1.msra.mxu0 0.0
    %1540 = vmatprep.subr.mxu0 0.0
    %1541 = vmatpush1.msra.mxu0 0.0
    %1542 = vmatprep.subr.mxu0 0.0
    %1543 = vmatpush1.msra.mxu0 0.0
    %1544 = vmatprep.subr.mxu0 0.0
    %1545 = vmatpush1.msra.mxu0 0.0
    %1546 = vmatprep.subr.mxu0 0.0
    %1547 = vmatpush1.msra.mxu0 0.0
    %1548 = vmatprep.subr.mxu0 0.0
    %1549 = vmatpush1.msra.mxu0 0.0
    %1550 = vmatprep.subr.mxu0 0.0
    %1551 = vmatpush1.msra.mxu0 0.0
    %1552 = vmatprep.subr.mxu0 0.0
    %1553 = vmatpush1.msra.mxu0 0.0
    %1554 = vmatprep.mubr.f32.mxu0 0.0
    %1555 = vmatmul.mubr.f32.gmra.mrb[0].mxu0 %v1488
    %v1556 = vpop.f32.mrb[0].mxu0
    %v1557 = vadd.f32 %v1184, %v1556
    %v1558 = vpop.f32.mrb[0].mxu0
    %1559 = vdwg.mxu0
    %v1560 = vxor.u32 %v1557, 2147483648
    %v1561 = vmul.f32 %v1560, 1.442695
    %v1562 = vpow.pop %v1561
    %v1563 = vadd.f32 %v1562, 1.0
    %v1564 = vrcp.pop %v1563
    %v1565 = vmul.f32 1.0, %v1564
    %v1566 = vmul.f32 %v1565, %v31
    %v1567 = vadd.f32 %v1566, %v32
    %v1568 = vmul.f32 %v1567, %v1478
    %1570 = vrot.lane.b32.xlu0 %v1567, 64
    %v1571 = vpop.permute.xlu0 %1570
    %v1573 = vmul.f32 %v1567, %v1571
    %1575 = vrot.lane.b32.xlu0 %v1573, 32
    %v1576 = vpop.permute.xlu0 %1575
    %v1578 = vadd.f32 %v1568, %v1576
    %v1579 = vtanh.pop %v1578
    %1581 = vrot.lane.b32.xlu0 %v1579, 64
    %v1582 = vpop.permute.xlu0 %1581
    %v1584 = vmul.f32 %v1567, %v1582
    %1586 = vrot.lane.b32.xlu0 %v1584, 32
    %v1587 = vpop.permute.xlu0 %1586
    %v1588 = vsel %vm273, %v1587, 0
    %1590 = vmatprep.subr.mxu0 0.0
    %1591 = vmatpush1.msra.mxu0 %v45
    %1592 = vmatprep.subr.mxu0 0.0
    %1593 = vmatpush1.msra.mxu0 %v46
    %1594 = vmatprep.subr.mxu0 0.0
    %1595 = vmatpush1.msra.mxu0 %v47
    %1596 = vmatprep.subr.mxu0 0.0
    %1597 = vmatpush1.msra.mxu0 %v48
    %1598 = vmatprep.subr.mxu0 0.0
    %1599 = vmatpush1.msra.mxu0 0.0
    %1600 = vmatprep.subr.mxu0 0.0
    %1601 = vmatpush1.msra.mxu0 0.0
    %1602 = vmatprep.subr.mxu0 0.0
    %1603 = vmatpush1.msra.mxu0 0.0
    %1604 = vmatprep.subr.mxu0 0.0
    %1605 = vmatpush1.msra.mxu0 0.0
    %1606 = vmatprep.subr.mxu0 0.0
    %1607 = vmatpush1.msra.mxu0 0.0
    %1608 = vmatprep.subr.mxu0 0.0
    %1609 = vmatpush1.msra.mxu0 0.0
    %1610 = vmatprep.subr.mxu0 0.0
    %1611 = vmatpush1.msra.mxu0 0.0
    %1612 = vmatprep.subr.mxu0 0.0
    %1613 = vmatpush1.msra.mxu0 0.0
    %1614 = vmatprep.subr.mxu0 0.0
    %1615 = vmatpush1.msra.mxu0 0.0
    %1616 = vmatprep.subr.mxu0 0.0
    %1617 = vmatpush1.msra.mxu0 0.0
    %1618 = vmatprep.subr.mxu0 0.0
    %1619 = vmatpush1.msra.mxu0 0.0
    %1620 = vmatprep.subr.mxu0 0.0
    %1621 = vmatpush1.msra.mxu0 0.0
    %1622 = vmatprep.subr.mxu0 0.0
    %1623 = vmatpush1.msra.mxu0 0.0
    %1624 = vmatprep.subr.mxu0 0.0
    %1625 = vmatpush1.msra.mxu0 0.0
    %1626 = vmatprep.subr.mxu0 0.0
    %1627 = vmatpush1.msra.mxu0 0.0
    %1628 = vmatprep.subr.mxu0 0.0
    %1629 = vmatpush1.msra.mxu0 0.0
    %1630 = vmatprep.subr.mxu0 0.0
    %1631 = vmatpush1.msra.mxu0 0.0
    %1632 = vmatprep.subr.mxu0 0.0
    %1633 = vmatpush1.msra.mxu0 0.0
    %1634 = vmatprep.subr.mxu0 0.0
    %1635 = vmatpush1.msra.mxu0 0.0
    %1636 = vmatprep.subr.mxu0 0.0
    %1637 = vmatpush1.msra.mxu0 0.0
    %1638 = vmatprep.subr.mxu0 0.0
    %1639 = vmatpush1.msra.mxu0 0.0
    %1640 = vmatprep.subr.mxu0 0.0
    %1641 = vmatpush1.msra.mxu0 0.0
    %1642 = vmatprep.subr.mxu0 0.0
    %1643 = vmatpush1.msra.mxu0 0.0
    %1644 = vmatprep.subr.mxu0 0.0
    %1645 = vmatpush1.msra.mxu0 0.0
    %1646 = vmatprep.subr.mxu0 0.0
    %1647 = vmatpush1.msra.mxu0 0.0
    %1648 = vmatprep.subr.mxu0 0.0
    %1649 = vmatpush1.msra.mxu0 0.0
    %1650 = vmatprep.subr.mxu0 0.0
    %1651 = vmatpush1.msra.mxu0 0.0
    %1652 = vmatprep.subr.mxu0 0.0
    %1653 = vmatpush1.msra.mxu0 0.0
    %1654 = vmatprep.mubr.f32.mxu0 0.0
    %1655 = vmatmul.mubr.f32.gmra.mrb[0].mxu0 %v1588
    %v1656 = vpop.f32.mrb[0].mxu0
    %v1657 = vadd.f32 %v1184, %v1656
    %v1658 = vpop.f32.mrb[0].mxu0
    %1659 = vdwg.mxu0
    %v1660 = vxor.u32 %v1657, 2147483648
    %v1661 = vmul.f32 %v1660, 1.442695
    %v1662 = vpow.pop %v1661
    %v1663 = vadd.f32 %v1662, 1.0
    %v1664 = vrcp.pop %v1663
    %v1665 = vmul.f32 1.0, %v1664
    %v1666 = vmul.f32 %v1665, %v31
    %v1667 = vadd.f32 %v1666, %v32
    %v1668 = vmul.f32 %v1667, %v1578
    %1670 = vrot.lane.b32.xlu0 %v1667, 64
    %v1671 = vpop.permute.xlu0 %1670
    %v1673 = vmul.f32 %v1667, %v1671
    %1675 = vrot.lane.b32.xlu0 %v1673, 32
    %v1676 = vpop.permute.xlu0 %1675
    %v1678 = vadd.f32 %v1668, %v1676
    %v1679 = vtanh.pop %v1678
    %1681 = vrot.lane.b32.xlu0 %v1679, 64
    %v1682 = vpop.permute.xlu0 %1681
    %v1684 = vmul.f32 %v1667, %v1682
    %1686 = vrot.lane.b32.xlu0 %v1684, 32
    %v1687 = vpop.permute.xlu0 %1686
    %v1688 = vsel %vm273, %v1687, 0
    %1690 = vmatprep.subr.mxu0 0.0
    %1691 = vmatpush1.msra.mxu0 %v45
    %1692 = vmatprep.subr.mxu0 0.0
    %1693 = vmatpush1.msra.mxu0 %v46
    %1694 = vmatprep.subr.mxu0 0.0
    %1695 = vmatpush1.msra.mxu0 %v47
    %1696 = vmatprep.subr.mxu0 0.0
    %1697 = vmatpush1.msra.mxu0 %v48
    %1698 = vmatprep.subr.mxu0 0.0
    %1699 = vmatpush1.msra.mxu0 0.0
    %1700 = vmatprep.subr.mxu0 0.0
    %1701 = vmatpush1.msra.mxu0 0.0
    %1702 = vmatprep.subr.mxu0 0.0
    %1703 = vmatpush1.msra.mxu0 0.0
    %1704 = vmatprep.subr.mxu0 0.0
    %1705 = vmatpush1.msra.mxu0 0.0
    %1706 = vmatprep.subr.mxu0 0.0
    %1707 = vmatpush1.msra.mxu0 0.0
    %1708 = vmatprep.subr.mxu0 0.0
    %1709 = vmatpush1.msra.mxu0 0.0
    %1710 = vmatprep.subr.mxu0 0.0
    %1711 = vmatpush1.msra.mxu0 0.0
    %1712 = vmatprep.subr.mxu0 0.0
    %1713 = vmatpush1.msra.mxu0 0.0
    %1714 = vmatprep.subr.mxu0 0.0
    %1715 = vmatpush1.msra.mxu0 0.0
    %1716 = vmatprep.subr.mxu0 0.0
    %1717 = vmatpush1.msra.mxu0 0.0
    %1718 = vmatprep.subr.mxu0 0.0
    %1719 = vmatpush1.msra.mxu0 0.0
    %1720 = vmatprep.subr.mxu0 0.0
    %1721 = vmatpush1.msra.mxu0 0.0
    %1722 = vmatprep.subr.mxu0 0.0
    %1723 = vmatpush1.msra.mxu0 0.0
    %1724 = vmatprep.subr.mxu0 0.0
    %1725 = vmatpush1.msra.mxu0 0.0
    %1726 = vmatprep.subr.mxu0 0.0
    %1727 = vmatpush1.msra.mxu0 0.0
    %1728 = vmatprep.subr.mxu0 0.0
    %1729 = vmatpush1.msra.mxu0 0.0
    %1730 = vmatprep.subr.mxu0 0.0
    %1731 = vmatpush1.msra.mxu0 0.0
    %1732 = vmatprep.subr.mxu0 0.0
    %1733 = vmatpush1.msra.mxu0 0.0
    %1734 = vmatprep.subr.mxu0 0.0
    %1735 = vmatpush1.msra.mxu0 0.0
    %1736 = vmatprep.subr.mxu0 0.0
    %1737 = vmatpush1.msra.mxu0 0.0
    %1738 = vmatprep.subr.mxu0 0.0
    %1739 = vmatpush1.msra.mxu0 0.0
    %1740 = vmatprep.subr.mxu0 0.0
    %1741 = vmatpush1.msra.mxu0 0.0
    %1742 = vmatprep.subr.mxu0 0.0
    %1743 = vmatpush1.msra.mxu0 0.0
    %1744 = vmatprep.subr.mxu0 0.0
    %1745 = vmatpush1.msra.mxu0 0.0
    %1746 = vmatprep.subr.mxu0 0.0
    %1747 = vmatpush1.msra.mxu0 0.0
    %1748 = vmatprep.subr.mxu0 0.0
    %1749 = vmatpush1.msra.mxu0 0.0
    %1750 = vmatprep.subr.mxu0 0.0
    %1751 = vmatpush1.msra.mxu0 0.0
    %1752 = vmatprep.subr.mxu0 0.0
    %1753 = vmatpush1.msra.mxu0 0.0
    %1754 = vmatprep.mubr.f32.mxu0 0.0
    %1755 = vmatmul.mubr.f32.gmra.mrb[0].mxu0 %v1688
    %v1756 = vpop.f32.mrb[0].mxu0
    %v1757 = vadd.f32 %v1184, %v1756
    %v1758 = vpop.f32.mrb[0].mxu0
    %1759 = vdwg.mxu0
    %v1760 = vxor.u32 %v1757, 2147483648
    %v1761 = vmul.f32 %v1760, 1.442695
    %v1762 = vpow.pop %v1761
    %v1763 = vadd.f32 %v1762, 1.0
    %v1764 = vrcp.pop %v1763
    %v1765 = vmul.f32 1.0, %v1764
    %v1766 = vmul.f32 %v1765, %v31
    %v1767 = vadd.f32 %v1766, %v32
    %v1768 = vmul.f32 %v1767, %v1678
    %1770 = vrot.lane.b32.xlu0 %v1767, 64
    %v1771 = vpop.permute.xlu0 %1770
    %v1773 = vmul.f32 %v1767, %v1771
    %1775 = vrot.lane.b32.xlu0 %v1773, 32
    %v1776 = vpop.permute.xlu0 %1775
    %v1778 = vadd.f32 %v1768, %v1776
    %v1779 = vtanh.pop %v1778
    %1781 = vrot.lane.b32.xlu0 %v1779, 64
    %v1782 = vpop.permute.xlu0 %1781
    %v1784 = vmul.f32 %v1767, %v1782
    %1786 = vrot.lane.b32.xlu0 %v1784, 32
    %v1787 = vpop.permute.xlu0 %1786
    %v1788 = vsel %vm273, %v1787, 0
    %1790 = vmatprep.subr.mxu0 0.0
    %1791 = vmatpush1.msra.mxu0 %v45
    %1792 = vmatprep.subr.mxu0 0.0
    %1793 = vmatpush1.msra.mxu0 %v46
    %1794 = vmatprep.subr.mxu0 0.0
    %1795 = vmatpush1.msra.mxu0 %v47
    %1796 = vmatprep.subr.mxu0 0.0
    %1797 = vmatpush1.msra.mxu0 %v48
    %1798 = vmatprep.subr.mxu0 0.0
    %1799 = vmatpush1.msra.mxu0 0.0
    %1800 = vmatprep.subr.mxu0 0.0
    %1801 = vmatpush1.msra.mxu0 0.0
    %1802 = vmatprep.subr.mxu0 0.0
    %1803 = vmatpush1.msra.mxu0 0.0
    %1804 = vmatprep.subr.mxu0 0.0
    %1805 = vmatpush1.msra.mxu0 0.0
    %1806 = vmatprep.subr.mxu0 0.0
    %1807 = vmatpush1.msra.mxu0 0.0
    %1808 = vmatprep.subr.mxu0 0.0
    %1809 = vmatpush1.msra.mxu0 0.0
    %1810 = vmatprep.subr.mxu0 0.0
    %1811 = vmatpush1.msra.mxu0 0.0
    %1812 = vmatprep.subr.mxu0 0.0
    %1813 = vmatpush1.msra.mxu0 0.0
    %1814 = vmatprep.subr.mxu0 0.0
    %1815 = vmatpush1.msra.mxu0 0.0
    %1816 = vmatprep.subr.mxu0 0.0
    %1817 = vmatpush1.msra.mxu0 0.0
    %1818 = vmatprep.subr.mxu0 0.0
    %1819 = vmatpush1.msra.mxu0 0.0
    %1820 = vmatprep.subr.mxu0 0.0
    %1821 = vmatpush1.msra.mxu0 0.0
    %1822 = vmatprep.subr.mxu0 0.0
    %1823 = vmatpush1.msra.mxu0 0.0
    %1824 = vmatprep.subr.mxu0 0.0
    %1825 = vmatpush1.msra.mxu0 0.0
    %1826 = vmatprep.subr.mxu0 0.0
    %1827 = vmatpush1.msra.mxu0 0.0
    %1828 = vmatprep.subr.mxu0 0.0
    %1829 = vmatpush1.msra.mxu0 0.0
    %1830 = vmatprep.subr.mxu0 0.0
    %1831 = vmatpush1.msra.mxu0 0.0
    %1832 = vmatprep.subr.mxu0 0.0
    %1833 = vmatpush1.msra.mxu0 0.0
    %1834 = vmatprep.subr.mxu0 0.0
    %1835 = vmatpush1.msra.mxu0 0.0
    %1836 = vmatprep.subr.mxu0 0.0
    %1837 = vmatpush1.msra.mxu0 0.0
    %1838 = vmatprep.subr.mxu0 0.0
    %1839 = vmatpush1.msra.mxu0 0.0
    %1840 = vmatprep.subr.mxu0 0.0
    %1841 = vmatpush1.msra.mxu0 0.0
    %1842 = vmatprep.subr.mxu0 0.0
    %1843 = vmatpush1.msra.mxu0 0.0
    %1844 = vmatprep.subr.mxu0 0.0
    %1845 = vmatpush1.msra.mxu0 0.0
    %1846 = vmatprep.subr.mxu0 0.0
    %1847 = vmatpush1.msra.mxu0 0.0
    %1848 = vmatprep.subr.mxu0 0.0
    %1849 = vmatpush1.msra.mxu0 0.0
    %1850 = vmatprep.subr.mxu0 0.0
    %1851 = vmatpush1.msra.mxu0 0.0
    %1852 = vmatprep.subr.mxu0 0.0
    %1853 = vmatpush1.msra.mxu0 0.0
    %1854 = vmatprep.mubr.f32.mxu0 0.0
    %1855 = vmatmul.mubr.f32.gmra.mrb[0].mxu0 %v1788
    %v1856 = vpop.f32.mrb[0].mxu0
    %v1857 = vadd.f32 %v1184, %v1856
    %v1858 = vpop.f32.mrb[0].mxu0
    %1859 = vdwg.mxu0
    %v1860 = vxor.u32 %v1857, 2147483648
    %v1861 = vmul.f32 %v1860, 1.442695
    %v1862 = vpow.pop %v1861
    %v1863 = vadd.f32 %v1862, 1.0
    %v1864 = vrcp.pop %v1863
    %v1865 = vmul.f32 1.0, %v1864
    %v1866 = vmul.f32 %v1865, %v31
    %v1867 = vadd.f32 %v1866, %v32
    %v1868 = vmul.f32 %v1867, %v1778
    %1870 = vrot.lane.b32.xlu0 %v1867, 64
    %v1871 = vpop.permute.xlu0 %1870
    %v1873 = vmul.f32 %v1867, %v1871
    %1875 = vrot.lane.b32.xlu0 %v1873, 32
    %v1876 = vpop.permute.xlu0 %1875
    %v1878 = vadd.f32 %v1868, %v1876
    %v1879 = vtanh.pop %v1878
    %1881 = vrot.lane.b32.xlu0 %v1879, 64
    %v1882 = vpop.permute.xlu0 %1881
    %v1884 = vmul.f32 %v1867, %v1882
    %v1885 = vld [vmem:[#allocation2 + $0x88] sm:$0xff]
    %v1886 = vld [vmem:[#allocation2 + $0x90] sm:$0xff]
    %v1887 = vld [vmem:[#allocation2 + $0x98] sm:$0xff]
    %v1888 = vld [vmem:[#allocation2 + $0xa0] sm:$0xff]
    %v1889 = vld [vmem:[#allocation2 + $0xa8] sm:$0x1]
    %v1890 = vlaneseq
    %v1891 = vshrl.u32 %v1890, 7
    %v1892 = vsub.s32 0, %v1891
    %v1893 = vrot.slane %v1889, %v1892
    %1895 = vrot.lane.b32.xlu0 %v1884, 32
    %v1896 = vpop.permute.xlu0 %1895
    %v1897 = vsel %vm273, %v1896, 0
    %1899 = vmatprep.subr.mxu0 0.0
    %1900 = vmatpush1.msra.mxu0 %v1885
    %1901 = vmatprep.subr.mxu0 0.0
    %1902 = vmatpush1.msra.mxu0 %v1886
    %1903 = vmatprep.subr.mxu0 0.0
    %1904 = vmatpush1.msra.mxu0 %v1887
    %1905 = vmatprep.subr.mxu0 0.0
    %1906 = vmatpush1.msra.mxu0 %v1888
    %1907 = vmatprep.subr.mxu0 0.0
    %1908 = vmatpush1.msra.mxu0 0.0
    %1909 = vmatprep.subr.mxu0 0.0
    %1910 = vmatpush1.msra.mxu0 0.0
    %1911 = vmatprep.subr.mxu0 0.0
    %1912 = vmatpush1.msra.mxu0 0.0
    %1913 = vmatprep.subr.mxu0 0.0
    %1914 = vmatpush1.msra.mxu0 0.0
    %1915 = vmatprep.subr.mxu0 0.0
    %1916 = vmatpush1.msra.mxu0 0.0
    %1917 = vmatprep.subr.mxu0 0.0
    %1918 = vmatpush1.msra.mxu0 0.0
    %1919 = vmatprep.subr.mxu0 0.0
    %1920 = vmatpush1.msra.mxu0 0.0
    %1921 = vmatprep.subr.mxu0 0.0
    %1922 = vmatpush1.msra.mxu0 0.0
    %1923 = vmatprep.subr.mxu0 0.0
    %1924 = vmatpush1.msra.mxu0 0.0
    %1925 = vmatprep.subr.mxu0 0.0
    %1926 = vmatpush1.msra.mxu0 0.0
    %1927 = vmatprep.subr.mxu0 0.0
    %1928 = vmatpush1.msra.mxu0 0.0
    %1929 = vmatprep.subr.mxu0 0.0
    %1930 = vmatpush1.msra.mxu0 0.0
    %1931 = vmatprep.subr.mxu0 0.0
    %1932 = vmatpush1.msra.mxu0 0.0
    %1933 = vmatprep.subr.mxu0 0.0
    %1934 = vmatpush1.msra.mxu0 0.0
    %1935 = vmatprep.subr.mxu0 0.0
    %1936 = vmatpush1.msra.mxu0 0.0
    %1937 = vmatprep.subr.mxu0 0.0
    %1938 = vmatpush1.msra.mxu0 0.0
    %1939 = vmatprep.subr.mxu0 0.0
    %1940 = vmatpush1.msra.mxu0 0.0
    %1941 = vmatprep.subr.mxu0 0.0
    %1942 = vmatpush1.msra.mxu0 0.0
    %1943 = vmatprep.subr.mxu0 0.0
    %1944 = vmatpush1.msra.mxu0 0.0
    %1945 = vmatprep.subr.mxu0 0.0
    %1946 = vmatpush1.msra.mxu0 0.0
    %1947 = vmatprep.subr.mxu0 0.0
    %1948 = vmatpush1.msra.mxu0 0.0
    %1949 = vmatprep.subr.mxu0 0.0
    %1950 = vmatpush1.msra.mxu0 0.0
    %1951 = vmatprep.subr.mxu0 0.0
    %1952 = vmatpush1.msra.mxu0 0.0
    %1953 = vmatprep.subr.mxu0 0.0
    %1954 = vmatpush1.msra.mxu0 0.0
    %1955 = vmatprep.subr.mxu0 0.0
    %1956 = vmatpush1.msra.mxu0 0.0
    %1957 = vmatprep.subr.mxu0 0.0
    %1958 = vmatpush1.msra.mxu0 0.0
    %1959 = vmatprep.subr.mxu0 0.0
    %1960 = vmatpush1.msra.mxu0 0.0
    %1961 = vmatprep.subr.mxu0 0.0
    %1962 = vmatpush1.msra.mxu0 0.0
    %1963 = vmatprep.mubr.f32.mxu0 0.0
    %1964 = vmatmul.mubr.f32.gmra.mrb[0].mxu0 %v1188
    %v1965 = vpop.f32.mrb[0].mxu0
    %v1966 = vadd.f32 %v1893, %v1965
    %v1967 = vpop.f32.mrb[0].mxu0
    %1968 = vmatprep.mubr.f32.mxu0 0.0
    %1969 = vmatmul.mubr.f32.gmra.mrb[0].mxu0 %v1288
    %v1970 = vpop.f32.mrb[0].mxu0
    %v1971 = vadd.f32 %v1893, %v1970
    %v1972 = vpop.f32.mrb[0].mxu0
    %1973 = vmatprep.mubr.f32.mxu0 0.0
    %1974 = vmatmul.mubr.f32.gmra.mrb[0].mxu0 %v1388
    %v1975 = vpop.f32.mrb[0].mxu0
    %v1976 = vadd.f32 %v1893, %v1975
    %v1977 = vpop.f32.mrb[0].mxu0
    %1978 = vmatprep.mubr.f32.mxu0 0.0
    %1979 = vmatmul.mubr.f32.gmra.mrb[0].mxu0 %v1488
    %v1980 = vpop.f32.mrb[0].mxu0
    %v1981 = vadd.f32 %v1893, %v1980
    %v1982 = vpop.f32.mrb[0].mxu0
    %1983 = vmatprep.mubr.f32.mxu0 0.0
    %1984 = vmatmul.mubr.f32.gmra.mrb[0].mxu0 %v1588
    %v1985 = vpop.f32.mrb[0].mxu0
    %v1986 = vadd.f32 %v1893, %v1985
    %v1987 = vpop.f32.mrb[0].mxu0
    %1988 = vmatprep.mubr.f32.mxu0 0.0
    %1989 = vmatmul.mubr.f32.gmra.mrb[0].mxu0 %v1688
    %v1990 = vpop.f32.mrb[0].mxu0
    %v1991 = vadd.f32 %v1893, %v1990
    %v1992 = vpop.f32.mrb[0].mxu0
    %1993 = vmatprep.mubr.f32.mxu0 0.0
    %1994 = vmatmul.mubr.f32.gmra.mrb[0].mxu0 %v1788
    %v1995 = vpop.f32.mrb[0].mxu0
    %v1996 = vadd.f32 %v1893, %v1995
    %v1997 = vpop.f32.mrb[0].mxu0
    %1998 = vmatprep.mubr.f32.mxu0 0.0
    %1999 = vmatmul.mubr.f32.gmra.mrb[0].mxu0 %v1897
    %v2000 = vpop.f32.mrb[0].mxu0
    %v2001 = vadd.f32 %v1893, %v2000
    %v2002 = vpop.f32.mrb[0].mxu0
    %2003 = vdwg.mxu0
    %2004 = vst [vmem:[#allocation5] sm:$0xff] %v1966
    %2005 = vst [vmem:[#allocation5 + $0x8] sm:$0xff] %v1971
    %2006 = vst [vmem:[#allocation5 + $0x10] sm:$0xff] %v1976
    %2007 = vst [vmem:[#allocation5 + $0x18] sm:$0xff] %v1981
    %2008 = vst [vmem:[#allocation5 + $0x20] sm:$0xff] %v1986
    %2009 = vst [vmem:[#allocation5 + $0x28] sm:$0xff] %v1991
    %2010 = vst [vmem:[#allocation5 + $0x30] sm:$0xff] %v1996
    %2011 = vst [vmem:[#allocation5 + $0x38] sm:$0xff] %v2001
    // Predicated region
    $region14: #{tpu_custom_call.1} parent=1 // pred_check
      _
    $region15: #{tpu_custom_call.1} parent=1 // pred_check_branch
      %2013 = sbr.rel (0) target = $region17
    $region16: #{tpu_custom_call.1} parent=1 // pred_region
      %s2015 = ssub.s32 1024, 1024
      %2016 = vsyncadd [#allocation4], %s2015
      %s2017 = sshll.u32 [#allocation5], 4
      %s2018 = int_to_ptr.vmem [resolvable:$true] %s2017
      %2023 = dma.vmem_to_hbm [thread:$0]  %s2018, 1024, %s2, [#allocation4], 128, 128, 8
    $region17: #{tpu_custom_call.1} parent=1 // pred_fallthru
      _
    // Predicated region
    $region18: #{tpu_custom_call.1} parent=1 // pred_check
      _
    $region19: #{tpu_custom_call.1} parent=1 // pred_check_branch
      %2025 = sbr.rel (0) target = $region21
    $region20: #{tpu_custom_call.1} parent=1 // pred_region
      %2026 = dma.done [#allocation4], 1024
    $region21: #{tpu_custom_call.1} parent=1 // pred_fallthru
      _
    %2027 = vsyncpa [#allocation3], 1
    %2028 = vsyncpa [#allocation4], 1

</llo_original>
